<compile_context>
chip_gen: v6e
topology: v6e:2x2x1
jax: 0.10.0
libtpu: 0.0.40
codegen_flags: <defaults>
</compile_context>

<pallas_src>
import jax
import jax.numpy as jnp
from jax.experimental import pallas as pl
from jax.experimental.pallas import tpu as pltpu


def _conv3x3_stacked(p0, p1, wband_ref, bias_ref):
    """3x3 'same' conv on an image stored as two row-parity planes (rows 2h / 2h+1).

    p0[h] / p1[h] hold image rows 2h / 2h+1 in lane-dense (W*Cin) layout.  wband_ref[dy] is the
    (W*Cin, W*Cout) banded matrix encoding the three dx taps of kernel row dy (with left/right
    zero padding folded in).  Returns the STACKED result (2H, W*Cout): rows [0:H) are output
    rows 2h, rows [H:2H) are output rows 2h+1 (bias added, no activation).  Stacking both
    parities along M halves the number of MXU weight pushes per conv.
    """
    H, L = p0.shape
    z = jnp.zeros((1, L), jnp.float32)
    p1_up = jnp.concatenate([z, p1[: H - 1, :]], axis=0)   # image row 2h-1 (zero at h=0)
    p0_dn = jnp.concatenate([p0[1:, :], z], axis=0)        # image row 2h+2 (zero at h=H-1)
    # output row 2h   reads image rows (2h-1, 2h,   2h+1)
    # output row 2h+1 reads image rows (2h,   2h+1, 2h+2)
    lhs0 = jnp.concatenate([p1_up, p0], axis=0)            # kernel row dy=0, both parities
    lhs1 = jnp.concatenate([p0, p1], axis=0)               # kernel row dy=1
    lhs2 = jnp.concatenate([p1, p0_dn], axis=0)            # kernel row dy=2
    dot = lambda a, b: jnp.dot(a, b, preferred_element_type=jnp.float32)
    return (dot(lhs0, wband_ref[0]) + dot(lhs1, wband_ref[1]) + dot(lhs2, wband_ref[2])
            + bias_ref[...])


def _upblock_kernel(x1_ref, x2_ref, mup_ref, x2p_ref, bcat_ref,
                    w1_ref, b1_ref, w2_ref, b2_ref, o_ref):
    # x1_ref : (1, H, W*Cin)          x2_ref : (1, H, 2*Wo*Ch2)  (both x2 row parities in lanes)
    # mup_ref: (W*Cin, 2L)            x2p_ref: (2*Wo*Ch2, 2L)    bcat_ref: (1, 2L)
    # w1_ref : (3, L, L1)  b1_ref: (1, L1)    w2_ref: (3, L1, L2)  b2_ref: (1, L2)
    # o_ref  : (1, 2H, L2)   rows [0:H) = output rows 2h, rows [H:2H) = output rows 2h+1
    H = x1_ref.shape[1]
    dot = lambda a, b: jnp.dot(a, b, preferred_element_type=jnp.float32)
    x1 = x1_ref[0]                      # (H, W*Cin)
    x2 = x2_ref[0]                      # (H, 2*Wo*Ch2)

    # Fused ConvTranspose2d(k=2, s=2) + channel-concat([up, x2]): BOTH output-row parities in a
    # single pair of matmuls (parity packed along lanes: cols [0:L)->rows 2h, [L:2L)->rows 2h+1).
    cat_both = dot(x1, mup_ref[...]) + dot(x2, x2p_ref[...]) + bcat_ref[...]   # (H, 2L)
    L = cat_both.shape[1] // 2
    p0 = cat_both[:, :L]                # concat rows 2h
    p1 = cat_both[:, L:]                # concat rows 2h+1

    # DoubleConv: (3x3 conv + ReLU) x 2, each conv = 3 banded MXU matmuls with parities stacked.
    m = jnp.maximum(_conv3x3_stacked(p0, p1, w1_ref, b1_ref), 0.0)             # (2H, L1)
    y = jnp.maximum(_conv3x3_stacked(m[:H, :], m[H:, :], w2_ref, b2_ref), 0.0) # (2H, L2)

    o_ref[0] = y.astype(o_ref.dtype)    # full-width unmasked store


@jax.jit
def upblock_forward(x1_nchw, x2_nchw, params):
    """UpBlock.forward(x1, x2). Inputs/outputs are NCHW like the PyTorch module."""
    wup_t, bup, w1, b1, w2, b2 = params
    N, Cin, H, W = x1_nchw.shape
    _, Ch2, Ho, Wo = x2_nchw.shape
    Ch = wup_t.shape[1]                 # ConvTranspose2d out channels (= Cin // 2)
    Ccat = Ch + Ch2                     # concat channels (= DoubleConv in_channels)
    Cmid = w1.shape[0]
    Cout = w2.shape[0]
    L = Wo * Ccat                       # lane width of concat rows   (128 in the test)
    L1 = Wo * Cmid                      # lane width after conv1
    L2 = Wo * Cout                      # lane width after conv2
    f32 = jnp.float32

    # --- activations -> lane-dense row slabs (channels innermost, then width) ---
    # x1r[n, h, w*Cin + ci]           = x1[n, ci, h, w]
    # x2r[n, h, a*Wo*Ch2 + w*Ch2 + c] = x2[n, c, 2h+a, w]
    x1r = jnp.transpose(x1_nchw, (0, 2, 3, 1)).astype(f32).reshape(N, H, W * Cin)
    x2r = jnp.transpose(x2_nchw, (0, 2, 3, 1)).astype(f32).reshape(N, H, 2 * Wo * Ch2)

    # --- packed constant weights (built once, lane-aligned) ---
    # ConvTranspose2d as matmul: cat_a[h,(2w+b)*Ccat+co] += x1[h,w,ci] * wup[ci,co,a,b];
    # both parities a=0/1 are packed along the output lanes (columns [0:L) / [L:2L)).
    e_up = jnp.concatenate([jnp.eye(Ch, dtype=f32), jnp.zeros((Ch, Ccat - Ch), f32)], axis=1)
    mup_cols = []
    for a in range(2):
        m = jnp.zeros((W * Cin, L), f32)
        for b in range(2):
            sel = jnp.zeros((W, Wo), f32).at[jnp.arange(W), 2 * jnp.arange(W) + b].set(1.0)
            m = m + jnp.kron(sel, wup_t[:, :, a, b].astype(f32) @ e_up)
        mup_cols.append(m)
    mup_both = jnp.concatenate(mup_cols, axis=1)                     # (W*Cin, 2L)

    # Skip-connection scatter: x2 channels land after the up channels, per row parity.
    e_x2 = jnp.concatenate([jnp.zeros((Ch2, Ch), f32), jnp.eye(Ch2, dtype=f32)], axis=1)
    blk = jnp.kron(jnp.eye(Wo, dtype=f32), e_x2)                     # (Wo*Ch2, L)
    zblk = jnp.zeros_like(blk)
    x2p_both = jnp.concatenate(
        [jnp.concatenate([blk, zblk], axis=0),                       # -> rows 2h   (cols [0:L))
         jnp.concatenate([zblk, blk], axis=0)], axis=1)              # -> rows 2h+1 (cols [L:2L))

    bcat_row = jnp.tile(jnp.concatenate([bup.astype(f32), jnp.zeros((Ccat - Ch,), f32)]), Wo)
    bcat_both = jnp.tile(bcat_row, 2).reshape(1, 2 * L)

    def conv_band(w_oihw):
        # OIHW (Co, Ci, 3, 3) -> (3, Wo*Ci, Wo*Co): dx taps + boundary zeroing folded per dy.
        w_t = jnp.transpose(w_oihw, (2, 3, 1, 0)).astype(f32)        # (3, 3, Ci, Co)
        bands = []
        for dy in range(3):
            m = jnp.zeros((Wo * w_oihw.shape[1], Wo * w_oihw.shape[0]), f32)
            for dx in range(3):
                m = m + jnp.kron(jnp.eye(Wo, k=1 - dx, dtype=f32), w_t[dy, dx])
            bands.append(m)
        return jnp.stack(bands)

    w1b = conv_band(w1)                                              # (3, L,  L1)
    w2b = conv_band(w2)                                              # (3, L1, L2)
    b1v = jnp.tile(b1.astype(f32), Wo).reshape(1, L1)
    b2v = jnp.tile(b2.astype(f32), Wo).reshape(1, L2)

    out = pl.pallas_call(
        _upblock_kernel,
        out_shape=jax.ShapeDtypeStruct((N, 2 * H, L2), f32),
        grid=(N,),
        in_specs=[
            pl.BlockSpec((1, H, W * Cin), lambda n: (n, 0, 0)),
            pl.BlockSpec((1, H, 2 * Wo * Ch2), lambda n: (n, 0, 0)),
            pl.BlockSpec((W * Cin, 2 * L), lambda n: (0, 0)),
            pl.BlockSpec((2 * Wo * Ch2, 2 * L), lambda n: (0, 0)),
            pl.BlockSpec((1, 2 * L), lambda n: (0, 0)),
            pl.BlockSpec((3, L, L1), lambda n: (0, 0, 0)),
            pl.BlockSpec((1, L1), lambda n: (0, 0)),
            pl.BlockSpec((3, L1, L2), lambda n: (0, 0, 0)),
            pl.BlockSpec((1, L2), lambda n: (0, 0)),
        ],
        out_specs=pl.BlockSpec((1, 2 * H, L2), lambda n: (n, 0, 0)),
        compiler_params=pltpu.CompilerParams(dimension_semantics=("parallel",)),
    )(x1r, x2r, mup_both, x2p_both, bcat_both, w1b, b1v, w2b, b2v)

    # out[n, a*H + h, w*Cout + c] == y[n, 2h+a, w, c]  ->  NHWC  ->  NCHW
    out_nhwc = (out.reshape(N, 2, H, Wo, Cout)
                   .transpose(0, 2, 1, 3, 4)
                   .reshape(N, Ho, Wo, Cout))
    return jnp.transpose(out_nhwc, (0, 3, 1, 2))


def ref_upblock(x1_nchw, x2_nchw, params):
    """Pure-JAX reference (no Pallas) for correctness checking."""
    wup_t, bup, w1, b1, w2, b2 = params
    x1 = jnp.transpose(x1_nchw, (0, 2, 3, 1)).astype(jnp.float32)
    x2 = jnp.transpose(x2_nchw, (0, 2, 3, 1)).astype(jnp.float32)
    N, H, W, Cin = x1.shape
    Ch = wup_t.shape[1]
    up = jnp.einsum('nhwc,coab->nhawbo', x1, wup_t).reshape(N, 2 * H, 2 * W, Ch) + bup
    cat = jnp.concatenate([up, x2], axis=-1)

    def conv(x, w_oihw, b):
        w_hwio = jnp.transpose(w_oihw, (2, 3, 1, 0))
        y = jax.lax.conv_general_dilated(
            x, w_hwio, (1, 1), 'SAME',
            dimension_numbers=('NHWC', 'HWIO', 'NHWC'))
        return jnp.maximum(y + b, 0.0)

    out = conv(conv(cat, w1, b1), w2, b2)
    return jnp.transpose(out, (0, 3, 1, 2))


if __name__ == "__main__":
    key = jax.random.PRNGKey(0)
    ks = jax.random.split(key, 8)

    N, Cin, H, W = 2, 4, 16, 16       # x1: (2, 4, 16, 16) NCHW
    Cout = 4
    Ch = Cin // 2                     # x2: (2, 2, 32, 32) NCHW

    x1 = jax.random.normal(ks[0], (N, Cin, H, W), jnp.float32)
    x2 = jax.random.normal(ks[1], (N, Ch, 2 * H, 2 * W), jnp.float32)

    # deterministic synthetic parameters (PyTorch layouts)
    wup_t = jax.random.normal(ks[2], (Cin, Ch, 2, 2), jnp.float32) * 0.2   # ConvTranspose2d
    bup = jax.random.normal(ks[3], (Ch,), jnp.float32) * 0.1
    w1 = jax.random.normal(ks[4], (Cout, Cin, 3, 3), jnp.float32) * 0.2    # Conv2d #1 (OIHW)
    b1 = jax.random.normal(ks[5], (Cout,), jnp.float32) * 0.1
    w2 = jax.random.normal(ks[6], (Cout, Cout, 3, 3), jnp.float32) * 0.2   # Conv2d #2 (OIHW)
    b2 = jax.random.normal(ks[7], (Cout,), jnp.float32) * 0.1
    params = (wup_t, bup, w1, b1, w2, b2)

    out = jax.block_until_ready(upblock_forward(x1, x2, params))
    ref = jax.block_until_ready(ref_upblock(x1, x2, params))

    assert out.shape == (N, Cout, 2 * H, 2 * W), out.shape
    max_err = float(jnp.max(jnp.abs(out - ref)))
    assert jnp.allclose(out, ref, rtol=1e-3, atol=1e-3), max_err
    print("KERNEL_OK")
</pallas_src>

<mosaic_0001>
module attributes {stable_mosaic.version = 11 : i64} {
  func.func @_upblock_kernel(%arg0: i32, %arg1: memref<1x16x64xf32, #tpu.memory_space<vmem>>, %arg2: memref<1x16x128xf32, #tpu.memory_space<vmem>>, %arg3: memref<64x256xf32, #tpu.memory_space<vmem>>, %arg4: memref<128x256xf32, #tpu.memory_space<vmem>>, %arg5: memref<1x256xf32, #tpu.memory_space<vmem>>, %arg6: memref<3x128x128xf32, #tpu.memory_space<vmem>>, %arg7: memref<1x128xf32, #tpu.memory_space<vmem>>, %arg8: memref<3x128x128xf32, #tpu.memory_space<vmem>>, %arg9: memref<1x128xf32, #tpu.memory_space<vmem>>, %arg10: memref<1x32x128xf32, #tpu.memory_space<vmem>>) attributes {dimension_semantics = [#tpu.dimension_semantics<parallel>], iteration_bounds = array<i64: 2>, scalar_prefetch = 0 : i64, scratch_operands = 0 : i64, tpu.core_type = #tpu.core_type<tc>, window_params = [{transform_indices = @transform_0, window_bounds = array<i64: 1, 16, 64>}, {transform_indices = @transform_1, window_bounds = array<i64: 1, 16, 128>}, {pipeline_mode = #tpu.pipeline_mode<synchronous>, transform_indices = @transform_2, window_bounds = array<i64: 64, 256>}, {pipeline_mode = #tpu.pipeline_mode<synchronous>, transform_indices = @transform_3, window_bounds = array<i64: 128, 256>}, {pipeline_mode = #tpu.pipeline_mode<synchronous>, transform_indices = @transform_4, window_bounds = array<i64: 1, 256>}, {pipeline_mode = #tpu.pipeline_mode<synchronous>, transform_indices = @transform_5, window_bounds = array<i64: 3, 128, 128>}, {pipeline_mode = #tpu.pipeline_mode<synchronous>, transform_indices = @transform_6, window_bounds = array<i64: 1, 128>}, {pipeline_mode = #tpu.pipeline_mode<synchronous>, transform_indices = @transform_7, window_bounds = array<i64: 3, 128, 128>}, {pipeline_mode = #tpu.pipeline_mode<synchronous>, transform_indices = @transform_8, window_bounds = array<i64: 1, 128>}, {transform_indices = @transform_9, window_bounds = array<i64: 1, 32, 128>}]} {
    %c0 = arith.constant 0 : index
    %c0_0 = arith.constant 0 : index
    %c0_1 = arith.constant 0 : index
    %0 = vector.load %arg1[%c0, %c0_0, %c0_1] : memref<1x16x64xf32, #tpu.memory_space<vmem>>, vector<1x16x64xf32>
    %1 = vector.shape_cast %0 : vector<1x16x64xf32> to vector<16x64xf32>
    %c0_2 = arith.constant 0 : index
    %c0_3 = arith.constant 0 : index
    %c0_4 = arith.constant 0 : index
    %2 = vector.load %arg2[%c0_2, %c0_3, %c0_4] : memref<1x16x128xf32, #tpu.memory_space<vmem>>, vector<1x16x128xf32>
    %3 = vector.shape_cast %2 : vector<1x16x128xf32> to vector<16x128xf32>
    %c0_5 = arith.constant 0 : index
    %c0_6 = arith.constant 0 : index
    %4 = vector.load %arg3[%c0_5, %c0_6] : memref<64x256xf32, #tpu.memory_space<vmem>>, vector<64x256xf32>
    %cst = arith.constant dense<0.000000e+00> : vector<16x256xf32>
    %5 = tpu.matmul %1, %4, %cst {dimension_numbers = #tpu.dot_dimension_numbers<[1], [0], [0], [1], [0, 0, 1, 1], [], []>} : vector<16x64xf32>, vector<64x256xf32>, vector<16x256xf32> -> vector<16x256xf32>
    %c0_7 = arith.constant 0 : index
    %c0_8 = arith.constant 0 : index
    %6 = vector.load %arg4[%c0_7, %c0_8] : memref<128x256xf32, #tpu.memory_space<vmem>>, vector<128x256xf32>
    %cst_9 = arith.constant dense<0.000000e+00> : vector<16x256xf32>
    %7 = tpu.matmul %3, %6, %cst_9 {dimension_numbers = #tpu.dot_dimension_numbers<[1], [0], [0], [1], [0, 0, 1, 1], [], []>} : vector<16x128xf32>, vector<128x256xf32>, vector<16x256xf32> -> vector<16x256xf32>
    %8 = arith.addf %5, %7 : vector<16x256xf32>
    %c0_10 = arith.constant 0 : index
    %c0_11 = arith.constant 0 : index
    %9 = vector.load %arg5[%c0_10, %c0_11] : memref<1x256xf32, #tpu.memory_space<vmem>>, vector<1x256xf32>
    %10 = vector.broadcast %9 : vector<1x256xf32> to vector<16x256xf32>
    %11 = arith.addf %8, %10 : vector<16x256xf32>
    %12 = vector.extract_strided_slice %11 {offsets = [0, 0], sizes = [16, 128], strides = [1, 1]} : vector<16x256xf32> to vector<16x128xf32>
    %13 = vector.extract_strided_slice %11 {offsets = [0, 128], sizes = [16, 128], strides = [1, 1]} : vector<16x256xf32> to vector<16x128xf32>
    %cst_12 = arith.constant 0.000000e+00 : f32
    %14 = vector.broadcast %cst_12 : f32 to vector<1x128xf32>
    %15 = vector.extract_strided_slice %13 {offsets = [0, 0], sizes = [15, 128], strides = [1, 1]} : vector<16x128xf32> to vector<15x128xf32>
    %16 = tpu.concatenate %14, %15 in 0 : vector<1x128xf32>, vector<15x128xf32> -> vector<16x128xf32>
    %17 = vector.extract_strided_slice %12 {offsets = [1, 0], sizes = [15, 128], strides = [1, 1]} : vector<16x128xf32> to vector<15x128xf32>
    %18 = tpu.concatenate %17, %14 in 0 : vector<15x128xf32>, vector<1x128xf32> -> vector<16x128xf32>
    %19 = tpu.concatenate %16, %12 in 0 : vector<16x128xf32>, vector<16x128xf32> -> vector<32x128xf32>
    %20 = tpu.concatenate %12, %13 in 0 : vector<16x128xf32>, vector<16x128xf32> -> vector<32x128xf32>
    %21 = tpu.concatenate %13, %18 in 0 : vector<16x128xf32>, vector<16x128xf32> -> vector<32x128xf32>
    %c0_13 = arith.constant 0 : index
    %c0_14 = arith.constant 0 : index
    %c0_15 = arith.constant 0 : index
    %22 = vector.load %arg6[%c0_13, %c0_14, %c0_15] : memref<3x128x128xf32, #tpu.memory_space<vmem>>, vector<1x128x128xf32>
    %23 = vector.shape_cast %22 : vector<1x128x128xf32> to vector<128x128xf32>
    %cst_16 = arith.constant dense<0.000000e+00> : vector<32x128xf32>
    %24 = tpu.matmul %19, %23, %cst_16 {dimension_numbers = #tpu.dot_dimension_numbers<[1], [0], [0], [1], [0, 0, 1, 1], [], []>} : vector<32x128xf32>, vector<128x128xf32>, vector<32x128xf32> -> vector<32x128xf32>
    %c1 = arith.constant 1 : index
    %c0_17 = arith.constant 0 : index
    %c0_18 = arith.constant 0 : index
    %25 = vector.load %arg6[%c1, %c0_17, %c0_18] : memref<3x128x128xf32, #tpu.memory_space<vmem>>, vector<1x128x128xf32>
    %26 = vector.shape_cast %25 : vector<1x128x128xf32> to vector<128x128xf32>
    %cst_19 = arith.constant dense<0.000000e+00> : vector<32x128xf32>
    %27 = tpu.matmul %20, %26, %cst_19 {dimension_numbers = #tpu.dot_dimension_numbers<[1], [0], [0], [1], [0, 0, 1, 1], [], []>} : vector<32x128xf32>, vector<128x128xf32>, vector<32x128xf32> -> vector<32x128xf32>
    %28 = arith.addf %24, %27 : vector<32x128xf32>
    %c2 = arith.constant 2 : index
    %c0_20 = arith.constant 0 : index
    %c0_21 = arith.constant 0 : index
    %29 = vector.load %arg6[%c2, %c0_20, %c0_21] : memref<3x128x128xf32, #tpu.memory_space<vmem>>, vector<1x128x128xf32>
    %30 = vector.shape_cast %29 : vector<1x128x128xf32> to vector<128x128xf32>
    %cst_22 = arith.constant dense<0.000000e+00> : vector<32x128xf32>
    %31 = tpu.matmul %21, %30, %cst_22 {dimension_numbers = #tpu.dot_dimension_numbers<[1], [0], [0], [1], [0, 0, 1, 1], [], []>} : vector<32x128xf32>, vector<128x128xf32>, vector<32x128xf32> -> vector<32x128xf32>
    %32 = arith.addf %28, %31 : vector<32x128xf32>
    %c0_23 = arith.constant 0 : index
    %c0_24 = arith.constant 0 : index
    %33 = vector.load %arg7[%c0_23, %c0_24] : memref<1x128xf32, #tpu.memory_space<vmem>>, vector<1x128xf32>
    %34 = vector.broadcast %33 : vector<1x128xf32> to vector<32x128xf32>
    %35 = arith.addf %32, %34 : vector<32x128xf32>
    %cst_25 = arith.constant 0.000000e+00 : f32
    %36 = vector.broadcast %cst_25 : f32 to vector<32x128xf32>
    %37 = arith.maximumf %35, %36 : vector<32x128xf32>
    %38 = vector.extract_strided_slice %37 {offsets = [0, 0], sizes = [16, 128], strides = [1, 1]} : vector<32x128xf32> to vector<16x128xf32>
    %39 = vector.extract_strided_slice %37 {offsets = [16, 0], sizes = [16, 128], strides = [1, 1]} : vector<32x128xf32> to vector<16x128xf32>
    %cst_26 = arith.constant 0.000000e+00 : f32
    %40 = vector.broadcast %cst_26 : f32 to vector<1x128xf32>
    %41 = vector.extract_strided_slice %39 {offsets = [0, 0], sizes = [15, 128], strides = [1, 1]} : vector<16x128xf32> to vector<15x128xf32>
    %42 = tpu.concatenate %40, %41 in 0 : vector<1x128xf32>, vector<15x128xf32> -> vector<16x128xf32>
    %43 = vector.extract_strided_slice %38 {offsets = [1, 0], sizes = [15, 128], strides = [1, 1]} : vector<16x128xf32> to vector<15x128xf32>
    %44 = tpu.concatenate %43, %40 in 0 : vector<15x128xf32>, vector<1x128xf32> -> vector<16x128xf32>
    %45 = tpu.concatenate %42, %38 in 0 : vector<16x128xf32>, vector<16x128xf32> -> vector<32x128xf32>
    %46 = tpu.concatenate %38, %39 in 0 : vector<16x128xf32>, vector<16x128xf32> -> vector<32x128xf32>
    %47 = tpu.concatenate %39, %44 in 0 : vector<16x128xf32>, vector<16x128xf32> -> vector<32x128xf32>
    %c0_27 = arith.constant 0 : index
    %c0_28 = arith.constant 0 : index
    %c0_29 = arith.constant 0 : index
    %48 = vector.load %arg8[%c0_27, %c0_28, %c0_29] : memref<3x128x128xf32, #tpu.memory_space<vmem>>, vector<1x128x128xf32>
    %49 = vector.shape_cast %48 : vector<1x128x128xf32> to vector<128x128xf32>
    %cst_30 = arith.constant dense<0.000000e+00> : vector<32x128xf32>
    %50 = tpu.matmul %45, %49, %cst_30 {dimension_numbers = #tpu.dot_dimension_numbers<[1], [0], [0], [1], [0, 0, 1, 1], [], []>} : vector<32x128xf32>, vector<128x128xf32>, vector<32x128xf32> -> vector<32x128xf32>
    %c1_31 = arith.constant 1 : index
    %c0_32 = arith.constant 0 : index
    %c0_33 = arith.constant 0 : index
    %51 = vector.load %arg8[%c1_31, %c0_32, %c0_33] : memref<3x128x128xf32, #tpu.memory_space<vmem>>, vector<1x128x128xf32>
    %52 = vector.shape_cast %51 : vector<1x128x128xf32> to vector<128x128xf32>
    %cst_34 = arith.constant dense<0.000000e+00> : vector<32x128xf32>
    %53 = tpu.matmul %46, %52, %cst_34 {dimension_numbers = #tpu.dot_dimension_numbers<[1], [0], [0], [1], [0, 0, 1, 1], [], []>} : vector<32x128xf32>, vector<128x128xf32>, vector<32x128xf32> -> vector<32x128xf32>
    %54 = arith.addf %50, %53 : vector<32x128xf32>
    %c2_35 = arith.constant 2 : index
    %c0_36 = arith.constant 0 : index
    %c0_37 = arith.constant 0 : index
    %55 = vector.load %arg8[%c2_35, %c0_36, %c0_37] : memref<3x128x128xf32, #tpu.memory_space<vmem>>, vector<1x128x128xf32>
    %56 = vector.shape_cast %55 : vector<1x128x128xf32> to vector<128x128xf32>
    %cst_38 = arith.constant dense<0.000000e+00> : vector<32x128xf32>
    %57 = tpu.matmul %47, %56, %cst_38 {dimension_numbers = #tpu.dot_dimension_numbers<[1], [0], [0], [1], [0, 0, 1, 1], [], []>} : vector<32x128xf32>, vector<128x128xf32>, vector<32x128xf32> -> vector<32x128xf32>
    %58 = arith.addf %54, %57 : vector<32x128xf32>
    %c0_39 = arith.constant 0 : index
    %c0_40 = arith.constant 0 : index
    %59 = vector.load %arg9[%c0_39, %c0_40] : memref<1x128xf32, #tpu.memory_space<vmem>>, vector<1x128xf32>
    %60 = vector.broadcast %59 : vector<1x128xf32> to vector<32x128xf32>
    %61 = arith.addf %58, %60 : vector<32x128xf32>
    %cst_41 = arith.constant 0.000000e+00 : f32
    %62 = vector.broadcast %cst_41 : f32 to vector<32x128xf32>
    %63 = arith.maximumf %61, %62 : vector<32x128xf32>
    %c0_42 = arith.constant 0 : index
    %c0_43 = arith.constant 0 : index
    %c0_44 = arith.constant 0 : index
    %64 = vector.load %arg10[%c0_42, %c0_43, %c0_44] : memref<1x32x128xf32, #tpu.memory_space<vmem>>, vector<1x32x128xf32>
    %65 = vector.shape_cast %64 : vector<1x32x128xf32> to vector<32x128xf32>
    %66 = vector.shape_cast %63 : vector<32x128xf32> to vector<1x32x128xf32>
    tpu.vector_store %arg10[%c0_42, %c0_43, %c0_44], %66 {strides = array<i32>} : memref<1x32x128xf32, #tpu.memory_space<vmem>>, vector<1x32x128xf32>,
    return
  }
  func.func @transform_0(%arg0: i32) -> (i32, i32, i32) {
    %c0_i32 = arith.constant 0 : i32
    %c0_i32_0 = arith.constant 0 : i32
    %c0_i32_1 = arith.constant 0 : i32
    return %arg0, %c0_i32, %c0_i32_0 : i32, i32, i32
  }
  func.func @transform_1(%arg0: i32) -> (i32, i32, i32) {
    %c0_i32 = arith.constant 0 : i32
    %c0_i32_0 = arith.constant 0 : i32
    %c0_i32_1 = arith.constant 0 : i32
    return %arg0, %c0_i32, %c0_i32_0 : i32, i32, i32
  }
  func.func @transform_2(%arg0: i32) -> (i32, i32) {
    %c0_i32 = arith.constant 0 : i32
    %c0_i32_0 = arith.constant 0 : i32
    %c0_i32_1 = arith.constant 0 : i32
    return %c0_i32, %c0_i32_0 : i32, i32
  }
  func.func @transform_3(%arg0: i32) -> (i32, i32) {
    %c0_i32 = arith.constant 0 : i32
    %c0_i32_0 = arith.constant 0 : i32
    %c0_i32_1 = arith.constant 0 : i32
    return %c0_i32, %c0_i32_0 : i32, i32
  }
  func.func @transform_4(%arg0: i32) -> (i32, i32) {
    %c0_i32 = arith.constant 0 : i32
    %c0_i32_0 = arith.constant 0 : i32
    %c0_i32_1 = arith.constant 0 : i32
    return %c0_i32, %c0_i32_0 : i32, i32
  }
  func.func @transform_5(%arg0: i32) -> (i32, i32, i32) {
    %c0_i32 = arith.constant 0 : i32
    %c0_i32_0 = arith.constant 0 : i32
    %c0_i32_1 = arith.constant 0 : i32
    %c0_i32_2 = arith.constant 0 : i32
    return %c0_i32, %c0_i32_0, %c0_i32_1 : i32, i32, i32
  }
  func.func @transform_6(%arg0: i32) -> (i32, i32) {
    %c0_i32 = arith.constant 0 : i32
    %c0_i32_0 = arith.constant 0 : i32
    %c0_i32_1 = arith.constant 0 : i32
    return %c0_i32, %c0_i32_0 : i32, i32
  }
  func.func @transform_7(%arg0: i32) -> (i32, i32, i32) {
    %c0_i32 = arith.constant 0 : i32
    %c0_i32_0 = arith.constant 0 : i32
    %c0_i32_1 = arith.constant 0 : i32
    %c0_i32_2 = arith.constant 0 : i32
    return %c0_i32, %c0_i32_0, %c0_i32_1 : i32, i32, i32
  }
  func.func @transform_8(%arg0: i32) -> (i32, i32) {
    %c0_i32 = arith.constant 0 : i32
    %c0_i32_0 = arith.constant 0 : i32
    %c0_i32_1 = arith.constant 0 : i32
    return %c0_i32, %c0_i32_0 : i32, i32
  }
  func.func @transform_9(%arg0: i32) -> (i32, i32, i32) {
    %c0_i32 = arith.constant 0 : i32
    %c0_i32_0 = arith.constant 0 : i32
    %c0_i32_1 = arith.constant 0 : i32
    return %arg0, %c0_i32, %c0_i32_0 : i32, i32, i32
  }
}

</mosaic_0001>

<llo_original>
// kernel: tile.22
$region0: #{tile.22}
  #allocation0 [shape = 's32[1]{0}', space=sflag, size = 0x4, scoped, tag = 'scoped memory for tile.22']
  %s0 = inlined_call_operand.vmem [shape: f32[4], index: 0, kind: input, shape index: {}]
  %s1 = inlined_call_operand.vmem [shape: f32[32,4], index: 1, kind: output, shape index: {}]
  // Predicated region
  $region2: #{tile.22} parent=0 // pred_check
    _
  $region3: #{tile.22} parent=0 // pred_check_branch
    %3 = sbr.rel (0) target = $region5
  $region4: #{tile.22} parent=0 // pred_region
    _
  $region5: #{tile.22} parent=0 // pred_fallthru
    _
  %v4 = vld [vmem:[%s0] ss:$0 sm:$0xff]
  %5 = vst [vmem:[%s1] sm:$0xff] %v4
  %s6 = scalar_lea.vmem %s1, 8
  %7 = vst [vmem:[%s6] sm:$0xff] %v4
  %s8 = scalar_lea.vmem %s1, 16
  %9 = vst [vmem:[%s8] sm:$0xff] %v4
  %s10 = scalar_lea.vmem %s1, 24
  %11 = vst [vmem:[%s10] sm:$0xff] %v4

// kernel: tile.25
$region0: #{tile.25}
  %s0 = inlined_call_operand.vmem [shape: f32[32,4], index: 0, kind: input, shape index: {}]
  %s1 = inlined_call_operand.vmem [shape: f32[128], index: 1, kind: output, shape index: {}]
  $region1: #{tile.25} parent=0
    #allocation0 [shape = 'u8[4096]{0}', space=vmem, size = 0x1000, scoped, tag = 'scoped mem for output reshape']
    %v2 = vld [vmem:[%s0] sm:$0x1]
    %vm3 = vcmask 31744
    %4 = vst.msk [vmem:[#allocation0] sm:$0x1] %vm3, %v2
    %s5 = scalar_lea.vmem %s0, 31
    %v6 = vld [vmem:[%s5] sm:$0x1]
    %7 = vrot.lane.b32.xlu0 %v6, 124
    %v8 = vpop.permute.xlu0 %7
    %vm9 = vcmask 1048544
    %10 = vst.msk [vmem:[#allocation0] sm:$0x1] %vm9, %v8
    %s11 = scalar_lea.vmem %s0, 30
    %v12 = vld [vmem:[%s11] sm:$0x1]
    %13 = vrot.lane.b32.xlu0 %v12, 120
    %v14 = vpop.permute.xlu0 %13
    %vm15 = vcmask 1015744
    %16 = vst.msk [vmem:[#allocation0] sm:$0x1] %vm15, %v14
    %s17 = scalar_lea.vmem %s0, 29
    %v18 = vld [vmem:[%s17] sm:$0x1]
    %19 = vrot.lane.b32.xlu0 %v18, 116
    %v20 = vpop.permute.xlu0 %19
    %vm21 = vcmask 982944
    %22 = vst.msk [vmem:[#allocation0] sm:$0x1] %vm21, %v20
    %s23 = scalar_lea.vmem %s0, 28
    %v24 = vld [vmem:[%s23] sm:$0x1]
    %25 = vrot.lane.b32.xlu0 %v24, 112
    %v26 = vpop.permute.xlu0 %25
    %vm27 = vcmask 950144
    %28 = vst.msk [vmem:[#allocation0] sm:$0x1] %vm27, %v26
    %s29 = scalar_lea.vmem %s0, 27
    %v30 = vld [vmem:[%s29] sm:$0x1]
    %31 = vrot.lane.b32.xlu0 %v30, 108
    %v32 = vpop.permute.xlu0 %31
    %vm33 = vcmask 917344
    %34 = vst.msk [vmem:[#allocation0] sm:$0x1] %vm33, %v32
    %s35 = scalar_lea.vmem %s0, 26
    %v36 = vld [vmem:[%s35] sm:$0x1]
    %37 = vrot.lane.b32.xlu0 %v36, 104
    %v38 = vpop.permute.xlu0 %37
    %vm39 = vcmask 884544
    %40 = vst.msk [vmem:[#allocation0] sm:$0x1] %vm39, %v38
    %s41 = scalar_lea.vmem %s0, 25
    %v42 = vld [vmem:[%s41] sm:$0x1]
    %43 = vrot.lane.b32.xlu0 %v42, 100
    %v44 = vpop.permute.xlu0 %43
    %vm45 = vcmask 851744
    %46 = vst.msk [vmem:[#allocation0] sm:$0x1] %vm45, %v44
    %s47 = scalar_lea.vmem %s0, 24
    %v48 = vld [vmem:[%s47] sm:$0x1]
    %49 = vrot.lane.b32.xlu0 %v48, 96
    %v50 = vpop.permute.xlu0 %49
    %vm51 = vcmask 818944
    %52 = vst.msk [vmem:[#allocation0] sm:$0x1] %vm51, %v50
    %s53 = scalar_lea.vmem %s0, 23
    %v54 = vld [vmem:[%s53] sm:$0x1]
    %55 = vrot.lane.b32.xlu0 %v54, 92
    %v56 = vpop.permute.xlu0 %55
    %vm57 = vcmask 786144
    %58 = vst.msk [vmem:[#allocation0] sm:$0x1] %vm57, %v56
    %s59 = scalar_lea.vmem %s0, 22
    %v60 = vld [vmem:[%s59] sm:$0x1]
    %61 = vrot.lane.b32.xlu0 %v60, 88
    %v62 = vpop.permute.xlu0 %61
    %vm63 = vcmask 753344
    %64 = vst.msk [vmem:[#allocation0] sm:$0x1] %vm63, %v62
    %s65 = scalar_lea.vmem %s0, 21
    %v66 = vld [vmem:[%s65] sm:$0x1]
    %67 = vrot.lane.b32.xlu0 %v66, 84
    %v68 = vpop.permute.xlu0 %67
    %vm69 = vcmask 720544
    %70 = vst.msk [vmem:[#allocation0] sm:$0x1] %vm69, %v68
    %s71 = scalar_lea.vmem %s0, 20
    %v72 = vld [vmem:[%s71] sm:$0x1]
    %73 = vrot.lane.b32.xlu0 %v72, 80
    %v74 = vpop.permute.xlu0 %73
    %vm75 = vcmask 687744
    %76 = vst.msk [vmem:[#allocation0] sm:$0x1] %vm75, %v74
    %s77 = scalar_lea.vmem %s0, 19
    %v78 = vld [vmem:[%s77] sm:$0x1]
    %79 = vrot.lane.b32.xlu0 %v78, 76
    %v80 = vpop.permute.xlu0 %79
    %vm81 = vcmask 654944
    %82 = vst.msk [vmem:[#allocation0] sm:$0x1] %vm81, %v80
    %s83 = scalar_lea.vmem %s0, 18
    %v84 = vld [vmem:[%s83] sm:$0x1]
    %85 = vrot.lane.b32.xlu0 %v84, 72
    %v86 = vpop.permute.xlu0 %85
    %vm87 = vcmask 622144
    %88 = vst.msk [vmem:[#allocation0] sm:$0x1] %vm87, %v86
    %s89 = scalar_lea.vmem %s0, 17
    %v90 = vld [vmem:[%s89] sm:$0x1]
    %91 = vrot.lane.b32.xlu0 %v90, 68
    %v92 = vpop.permute.xlu0 %91
    %vm93 = vcmask 589344
    %94 = vst.msk [vmem:[#allocation0] sm:$0x1] %vm93, %v92
    %s95 = scalar_lea.vmem %s0, 16
    %v96 = vld [vmem:[%s95] sm:$0x1]
    %97 = vrot.lane.b32.xlu0 %v96, 64
    %v98 = vpop.permute.xlu0 %97
    %vm99 = vcmask 556544
    %100 = vst.msk [vmem:[#allocation0] sm:$0x1] %vm99, %v98
    %s101 = scalar_lea.vmem %s0, 15
    %v102 = vld [vmem:[%s101] sm:$0x1]
    %103 = vrot.lane.b32.xlu0 %v102, 60
    %v104 = vpop.permute.xlu0 %103
    %vm105 = vcmask 523744
    %106 = vst.msk [vmem:[#allocation0] sm:$0x1] %vm105, %v104
    %s107 = scalar_lea.vmem %s0, 14
    %v108 = vld [vmem:[%s107] sm:$0x1]
    %109 = vrot.lane.b32.xlu0 %v108, 56
    %v110 = vpop.permute.xlu0 %109
    %vm111 = vcmask 490944
    %112 = vst.msk [vmem:[#allocation0] sm:$0x1] %vm111, %v110
    %s113 = scalar_lea.vmem %s0, 13
    %v114 = vld [vmem:[%s113] sm:$0x1]
    %115 = vrot.lane.b32.xlu0 %v114, 52
    %v116 = vpop.permute.xlu0 %115
    %vm117 = vcmask 458144
    %118 = vst.msk [vmem:[#allocation0] sm:$0x1] %vm117, %v116
    %s119 = scalar_lea.vmem %s0, 12
    %v120 = vld [vmem:[%s119] sm:$0x1]
    %121 = vrot.lane.b32.xlu0 %v120, 48
    %v122 = vpop.permute.xlu0 %121
    %vm123 = vcmask 425344
    %124 = vst.msk [vmem:[#allocation0] sm:$0x1] %vm123, %v122
    %s125 = scalar_lea.vmem %s0, 11
    %v126 = vld [vmem:[%s125] sm:$0x1]
    %127 = vrot.lane.b32.xlu0 %v126, 44
    %v128 = vpop.permute.xlu0 %127
    %vm129 = vcmask 392544
    %130 = vst.msk [vmem:[#allocation0] sm:$0x1] %vm129, %v128
    %s131 = scalar_lea.vmem %s0, 10
    %v132 = vld [vmem:[%s131] sm:$0x1]
    %133 = vrot.lane.b32.xlu0 %v132, 40
    %v134 = vpop.permute.xlu0 %133
    %vm135 = vcmask 359744
    %136 = vst.msk [vmem:[#allocation0] sm:$0x1] %vm135, %v134
    %s137 = scalar_lea.vmem %s0, 9
    %v138 = vld [vmem:[%s137] sm:$0x1]
    %139 = vrot.lane.b32.xlu0 %v138, 36
    %v140 = vpop.permute.xlu0 %139
    %vm141 = vcmask 326944
    %142 = vst.msk [vmem:[#allocation0] sm:$0x1] %vm141, %v140
    %s143 = scalar_lea.vmem %s0, 8
    %v144 = vld [vmem:[%s143] sm:$0x1]
    %145 = vrot.lane.b32.xlu0 %v144, 32
    %v146 = vpop.permute.xlu0 %145
    %vm147 = vcmask 294144
    %148 = vst.msk [vmem:[#allocation0] sm:$0x1] %vm147, %v146
    %s149 = scalar_lea.vmem %s0, 7
    %v150 = vld [vmem:[%s149] sm:$0x1]
    %151 = vrot.lane.b32.xlu0 %v150, 28
    %v152 = vpop.permute.xlu0 %151
    %vm153 = vcmask 261344
    %154 = vst.msk [vmem:[#allocation0] sm:$0x1] %vm153, %v152
    %s155 = scalar_lea.vmem %s0, 6
    %v156 = vld [vmem:[%s155] sm:$0x1]
    %157 = vrot.lane.b32.xlu0 %v156, 24
    %v158 = vpop.permute.xlu0 %157
    %vm159 = vcmask 228544
    %160 = vst.msk [vmem:[#allocation0] sm:$0x1] %vm159, %v158
    %s161 = scalar_lea.vmem %s0, 5
    %v162 = vld [vmem:[%s161] sm:$0x1]
    %163 = vrot.lane.b32.xlu0 %v162, 20
    %v164 = vpop.permute.xlu0 %163
    %vm165 = vcmask 195744
    %166 = vst.msk [vmem:[#allocation0] sm:$0x1] %vm165, %v164
    %s167 = scalar_lea.vmem %s0, 4
    %v168 = vld [vmem:[%s167] sm:$0x1]
    %169 = vrot.lane.b32.xlu0 %v168, 16
    %v170 = vpop.permute.xlu0 %169
    %vm171 = vcmask 162944
    %172 = vst.msk [vmem:[#allocation0] sm:$0x1] %vm171, %v170
    %s173 = scalar_lea.vmem %s0, 3
    %v174 = vld [vmem:[%s173] sm:$0x1]
    %175 = vrot.lane.b32.xlu0 %v174, 12
    %v176 = vpop.permute.xlu0 %175
    %vm177 = vcmask 130144
    %178 = vst.msk [vmem:[#allocation0] sm:$0x1] %vm177, %v176
    %s179 = scalar_lea.vmem %s0, 2
    %v180 = vld [vmem:[%s179] sm:$0x1]
    %181 = vrot.lane.b32.xlu0 %v180, 8
    %v182 = vpop.permute.xlu0 %181
    %vm183 = vcmask 97344
    %184 = vst.msk [vmem:[#allocation0] sm:$0x1] %vm183, %v182
    %s185 = scalar_lea.vmem %s0, 1
    %v186 = vld [vmem:[%s185] sm:$0x1]
    %187 = vrot.lane.b32.xlu0 %v186, 4
    %v188 = vpop.permute.xlu0 %187
    %vm189 = vcmask 64544
    %190 = vst.msk [vmem:[#allocation0] sm:$0x1] %vm189, %v188
    %s192 = sshll.u32 1, 1
    %s193 = ssub.s32 %s192, 1
    %v195 = vld [vmem:[#allocation0] sm:%s193]
    %s196 = sshll.u32 1, 1
    %s197 = ssub.s32 %s196, 1
    %198 = vst [vmem:[%s1] sm:%s197] %v195

// kernel: tile.26
$region0: #{tile.26}
  #allocation0 [shape = 's32[1]{0}', space=sflag, size = 0x4, scoped, tag = 'scoped memory for tile.26']
  %s0 = inlined_call_operand.vmem [shape: f32[128], index: 0, kind: input, shape index: {}]
  %s1 = inlined_call_operand.vmem [shape: f32[2,128], index: 1, kind: output, shape index: {}]
  // Predicated region
  $region2: #{tile.26} parent=0 // pred_check
    _
  $region3: #{tile.26} parent=0 // pred_check_branch
    %3 = sbr.rel (0) target = $region5
  $region4: #{tile.26} parent=0 // pred_region
    _
  $region5: #{tile.26} parent=0 // pred_fallthru
    _
  %v4 = vld [vmem:[%s0] ss:$0 sm:$0xff]
  %5 = vst [vmem:[%s1] sm:$0x3] %v4

// kernel: tile.32
$region0: #{tile.32}
  %s0 = inlined_call_operand.vmem [shape: f32[32,4], index: 0, kind: input, shape index: {}]
  %s1 = inlined_call_operand.vmem [shape: f32[1,128], index: 1, kind: output, shape index: {}]
  $region1: #{tile.32} parent=0
    #allocation0 [shape = 'u8[4096]{0}', space=vmem, size = 0x1000, scoped, tag = 'scoped mem for output reshape']
    %v2 = vld [vmem:[%s0] sm:$0x1]
    %vm3 = vcmask 31744
    %4 = vst.msk [vmem:[#allocation0] sm:$0x1] %vm3, %v2
    %s5 = scalar_lea.vmem %s0, 31
    %v6 = vld [vmem:[%s5] sm:$0x1]
    %7 = vrot.lane.b32.xlu0 %v6, 124
    %v8 = vpop.permute.xlu0 %7
    %vm9 = vcmask 1048544
    %10 = vst.msk [vmem:[#allocation0] sm:$0x1] %vm9, %v8
    %s11 = scalar_lea.vmem %s0, 30
    %v12 = vld [vmem:[%s11] sm:$0x1]
    %13 = vrot.lane.b32.xlu0 %v12, 120
    %v14 = vpop.permute.xlu0 %13
    %vm15 = vcmask 1015744
    %16 = vst.msk [vmem:[#allocation0] sm:$0x1] %vm15, %v14
    %s17 = scalar_lea.vmem %s0, 29
    %v18 = vld [vmem:[%s17] sm:$0x1]
    %19 = vrot.lane.b32.xlu0 %v18, 116
    %v20 = vpop.permute.xlu0 %19
    %vm21 = vcmask 982944
    %22 = vst.msk [vmem:[#allocation0] sm:$0x1] %vm21, %v20
    %s23 = scalar_lea.vmem %s0, 28
    %v24 = vld [vmem:[%s23] sm:$0x1]
    %25 = vrot.lane.b32.xlu0 %v24, 112
    %v26 = vpop.permute.xlu0 %25
    %vm27 = vcmask 950144
    %28 = vst.msk [vmem:[#allocation0] sm:$0x1] %vm27, %v26
    %s29 = scalar_lea.vmem %s0, 27
    %v30 = vld [vmem:[%s29] sm:$0x1]
    %31 = vrot.lane.b32.xlu0 %v30, 108
    %v32 = vpop.permute.xlu0 %31
    %vm33 = vcmask 917344
    %34 = vst.msk [vmem:[#allocation0] sm:$0x1] %vm33, %v32
    %s35 = scalar_lea.vmem %s0, 26
    %v36 = vld [vmem:[%s35] sm:$0x1]
    %37 = vrot.lane.b32.xlu0 %v36, 104
    %v38 = vpop.permute.xlu0 %37
    %vm39 = vcmask 884544
    %40 = vst.msk [vmem:[#allocation0] sm:$0x1] %vm39, %v38
    %s41 = scalar_lea.vmem %s0, 25
    %v42 = vld [vmem:[%s41] sm:$0x1]
    %43 = vrot.lane.b32.xlu0 %v42, 100
    %v44 = vpop.permute.xlu0 %43
    %vm45 = vcmask 851744
    %46 = vst.msk [vmem:[#allocation0] sm:$0x1] %vm45, %v44
    %s47 = scalar_lea.vmem %s0, 24
    %v48 = vld [vmem:[%s47] sm:$0x1]
    %49 = vrot.lane.b32.xlu0 %v48, 96
    %v50 = vpop.permute.xlu0 %49
    %vm51 = vcmask 818944
    %52 = vst.msk [vmem:[#allocation0] sm:$0x1] %vm51, %v50
    %s53 = scalar_lea.vmem %s0, 23
    %v54 = vld [vmem:[%s53] sm:$0x1]
    %55 = vrot.lane.b32.xlu0 %v54, 92
    %v56 = vpop.permute.xlu0 %55
    %vm57 = vcmask 786144
    %58 = vst.msk [vmem:[#allocation0] sm:$0x1] %vm57, %v56
    %s59 = scalar_lea.vmem %s0, 22
    %v60 = vld [vmem:[%s59] sm:$0x1]
    %61 = vrot.lane.b32.xlu0 %v60, 88
    %v62 = vpop.permute.xlu0 %61
    %vm63 = vcmask 753344
    %64 = vst.msk [vmem:[#allocation0] sm:$0x1] %vm63, %v62
    %s65 = scalar_lea.vmem %s0, 21
    %v66 = vld [vmem:[%s65] sm:$0x1]
    %67 = vrot.lane.b32.xlu0 %v66, 84
    %v68 = vpop.permute.xlu0 %67
    %vm69 = vcmask 720544
    %70 = vst.msk [vmem:[#allocation0] sm:$0x1] %vm69, %v68
    %s71 = scalar_lea.vmem %s0, 20
    %v72 = vld [vmem:[%s71] sm:$0x1]
    %73 = vrot.lane.b32.xlu0 %v72, 80
    %v74 = vpop.permute.xlu0 %73
    %vm75 = vcmask 687744
    %76 = vst.msk [vmem:[#allocation0] sm:$0x1] %vm75, %v74
    %s77 = scalar_lea.vmem %s0, 19
    %v78 = vld [vmem:[%s77] sm:$0x1]
    %79 = vrot.lane.b32.xlu0 %v78, 76
    %v80 = vpop.permute.xlu0 %79
    %vm81 = vcmask 654944
    %82 = vst.msk [vmem:[#allocation0] sm:$0x1] %vm81, %v80
    %s83 = scalar_lea.vmem %s0, 18
    %v84 = vld [vmem:[%s83] sm:$0x1]
    %85 = vrot.lane.b32.xlu0 %v84, 72
    %v86 = vpop.permute.xlu0 %85
    %vm87 = vcmask 622144
    %88 = vst.msk [vmem:[#allocation0] sm:$0x1] %vm87, %v86
    %s89 = scalar_lea.vmem %s0, 17
    %v90 = vld [vmem:[%s89] sm:$0x1]
    %91 = vrot.lane.b32.xlu0 %v90, 68
    %v92 = vpop.permute.xlu0 %91
    %vm93 = vcmask 589344
    %94 = vst.msk [vmem:[#allocation0] sm:$0x1] %vm93, %v92
    %s95 = scalar_lea.vmem %s0, 16
    %v96 = vld [vmem:[%s95] sm:$0x1]
    %97 = vrot.lane.b32.xlu0 %v96, 64
    %v98 = vpop.permute.xlu0 %97
    %vm99 = vcmask 556544
    %100 = vst.msk [vmem:[#allocation0] sm:$0x1] %vm99, %v98
    %s101 = scalar_lea.vmem %s0, 15
    %v102 = vld [vmem:[%s101] sm:$0x1]
    %103 = vrot.lane.b32.xlu0 %v102, 60
    %v104 = vpop.permute.xlu0 %103
    %vm105 = vcmask 523744
    %106 = vst.msk [vmem:[#allocation0] sm:$0x1] %vm105, %v104
    %s107 = scalar_lea.vmem %s0, 14
    %v108 = vld [vmem:[%s107] sm:$0x1]
    %109 = vrot.lane.b32.xlu0 %v108, 56
    %v110 = vpop.permute.xlu0 %109
    %vm111 = vcmask 490944
    %112 = vst.msk [vmem:[#allocation0] sm:$0x1] %vm111, %v110
    %s113 = scalar_lea.vmem %s0, 13
    %v114 = vld [vmem:[%s113] sm:$0x1]
    %115 = vrot.lane.b32.xlu0 %v114, 52
    %v116 = vpop.permute.xlu0 %115
    %vm117 = vcmask 458144
    %118 = vst.msk [vmem:[#allocation0] sm:$0x1] %vm117, %v116
    %s119 = scalar_lea.vmem %s0, 12
    %v120 = vld [vmem:[%s119] sm:$0x1]
    %121 = vrot.lane.b32.xlu0 %v120, 48
    %v122 = vpop.permute.xlu0 %121
    %vm123 = vcmask 425344
    %124 = vst.msk [vmem:[#allocation0] sm:$0x1] %vm123, %v122
    %s125 = scalar_lea.vmem %s0, 11
    %v126 = vld [vmem:[%s125] sm:$0x1]
    %127 = vrot.lane.b32.xlu0 %v126, 44
    %v128 = vpop.permute.xlu0 %127
    %vm129 = vcmask 392544
    %130 = vst.msk [vmem:[#allocation0] sm:$0x1] %vm129, %v128
    %s131 = scalar_lea.vmem %s0, 10
    %v132 = vld [vmem:[%s131] sm:$0x1]
    %133 = vrot.lane.b32.xlu0 %v132, 40
    %v134 = vpop.permute.xlu0 %133
    %vm135 = vcmask 359744
    %136 = vst.msk [vmem:[#allocation0] sm:$0x1] %vm135, %v134
    %s137 = scalar_lea.vmem %s0, 9
    %v138 = vld [vmem:[%s137] sm:$0x1]
    %139 = vrot.lane.b32.xlu0 %v138, 36
    %v140 = vpop.permute.xlu0 %139
    %vm141 = vcmask 326944
    %142 = vst.msk [vmem:[#allocation0] sm:$0x1] %vm141, %v140
    %s143 = scalar_lea.vmem %s0, 8
    %v144 = vld [vmem:[%s143] sm:$0x1]
    %145 = vrot.lane.b32.xlu0 %v144, 32
    %v146 = vpop.permute.xlu0 %145
    %vm147 = vcmask 294144
    %148 = vst.msk [vmem:[#allocation0] sm:$0x1] %vm147, %v146
    %s149 = scalar_lea.vmem %s0, 7
    %v150 = vld [vmem:[%s149] sm:$0x1]
    %151 = vrot.lane.b32.xlu0 %v150, 28
    %v152 = vpop.permute.xlu0 %151
    %vm153 = vcmask 261344
    %154 = vst.msk [vmem:[#allocation0] sm:$0x1] %vm153, %v152
    %s155 = scalar_lea.vmem %s0, 6
    %v156 = vld [vmem:[%s155] sm:$0x1]
    %157 = vrot.lane.b32.xlu0 %v156, 24
    %v158 = vpop.permute.xlu0 %157
    %vm159 = vcmask 228544
    %160 = vst.msk [vmem:[#allocation0] sm:$0x1] %vm159, %v158
    %s161 = scalar_lea.vmem %s0, 5
    %v162 = vld [vmem:[%s161] sm:$0x1]
    %163 = vrot.lane.b32.xlu0 %v162, 20
    %v164 = vpop.permute.xlu0 %163
    %vm165 = vcmask 195744
    %166 = vst.msk [vmem:[#allocation0] sm:$0x1] %vm165, %v164
    %s167 = scalar_lea.vmem %s0, 4
    %v168 = vld [vmem:[%s167] sm:$0x1]
    %169 = vrot.lane.b32.xlu0 %v168, 16
    %v170 = vpop.permute.xlu0 %169
    %vm171 = vcmask 162944
    %172 = vst.msk [vmem:[#allocation0] sm:$0x1] %vm171, %v170
    %s173 = scalar_lea.vmem %s0, 3
    %v174 = vld [vmem:[%s173] sm:$0x1]
    %175 = vrot.lane.b32.xlu0 %v174, 12
    %v176 = vpop.permute.xlu0 %175
    %vm177 = vcmask 130144
    %178 = vst.msk [vmem:[#allocation0] sm:$0x1] %vm177, %v176
    %s179 = scalar_lea.vmem %s0, 2
    %v180 = vld [vmem:[%s179] sm:$0x1]
    %181 = vrot.lane.b32.xlu0 %v180, 8
    %v182 = vpop.permute.xlu0 %181
    %vm183 = vcmask 97344
    %184 = vst.msk [vmem:[#allocation0] sm:$0x1] %vm183, %v182
    %s185 = scalar_lea.vmem %s0, 1
    %v186 = vld [vmem:[%s185] sm:$0x1]
    %187 = vrot.lane.b32.xlu0 %v186, 4
    %v188 = vpop.permute.xlu0 %187
    %vm189 = vcmask 64544
    %190 = vst.msk [vmem:[#allocation0] sm:$0x1] %vm189, %v188
    %s192 = sshll.u32 1, 1
    %s193 = ssub.s32 %s192, 1
    %v195 = vld [vmem:[#allocation0] sm:%s193]
    %s196 = sshll.u32 1, 1
    %s197 = ssub.s32 %s196, 1
    %198 = vst [vmem:[%s1] sm:%s197] %v195

// kernel: upblock_forward.1
$region0: #{upblock_forward.1}
  #allocation0 [shape = 'u32[]', space=smem, size = 0x4, offset = 0x4, fixed_abs, tag = 'smem constant byte address 0x4 - core index']
  #allocation1 [shape = 'u32[144,128]{1,0:T(1,128)}', space=vmem, size = 0x12000, scoped, tag = 'internal scratch']
  %s0 = inlined_call_operand.vmem [shape: f32[2,16,64], index: 0, kind: input, shape index: {}]
  %s1 = inlined_call_operand.vmem [shape: f32[2,16,128], index: 1, kind: input, shape index: {}]
  %s2 = inlined_call_operand.vmem [shape: f32[64,256], index: 2, kind: input, shape index: {}]
  %s3 = inlined_call_operand.vmem [shape: f32[128,256], index: 3, kind: input, shape index: {}]
  %s4 = inlined_call_operand.vmem [shape: f32[1,256], index: 4, kind: input, shape index: {}]
  %s5 = inlined_call_operand.vmem [shape: f32[3,128,128], index: 5, kind: input, shape index: {}]
  %s6 = inlined_call_operand.vmem [shape: f32[1,128], index: 6, kind: input, shape index: {}]
  %s7 = inlined_call_operand.vmem [shape: f32[3,128,128], index: 7, kind: input, shape index: {}]
  %s8 = inlined_call_operand.vmem [shape: f32[1,128], index: 8, kind: input, shape index: {}]
  %s9 = inlined_call_operand.vmem [shape: f32[2,32,128], index: 9, kind: output, shape index: {}]
  %s10 = sld [smem:[#allocation0]]
  $region69: #{upblock_forward.1} parent=0
    _
  %s12 = ssub.s32 1, %s10
  %s13 = scalar_select 0, %s12, %s10
  loop: start=0, step=1, limit=4
  $region2: #{upblock_forward.1} parent=0 // loop_pre_header
    _
  $region3: #{upblock_forward.1} parent=0 // loop_header
    %s15 = sphi 0, %s19
    %p16 = scmp.ge.s32.totalorder %s15, 4
    %s25 = sphi 0, %s27
    %s28 = sphi 0, %s25
    %s29 = sphi 0, %s28
    %s45 = sphi 0, %s29
    %s51 = sphi 0, %s53
    %s54 = sphi 0, %s51
    %s55 = sphi 0, %s54
    %s71 = sphi 0, %s55
    %s75 = sphi 0, %s75
    %s77 = sphi 0, %s75
    %s78 = sphi 0, %s77
    %s92 = sphi 0, %s78
    %s96 = sphi 0, %s96
    %s98 = sphi 0, %s96
    %s99 = sphi 0, %s98
    %s113 = sphi 0, %s99
    %s117 = sphi 0, %s117
    %s119 = sphi 0, %s117
    %s120 = sphi 0, %s119
    %s134 = sphi 0, %s120
    %s138 = sphi 0, %s138
    %s140 = sphi 0, %s138
    %s141 = sphi 0, %s140
    %s155 = sphi 0, %s141
    %s159 = sphi 0, %s159
    %s161 = sphi 0, %s159
    %s162 = sphi 0, %s161
    %s176 = sphi 0, %s162
    %s180 = sphi 0, %s180
    %s182 = sphi 0, %s180
    %s183 = sphi 0, %s182
    %s197 = sphi 0, %s183
    %s201 = sphi 0, %s201
    %s203 = sphi 0, %s201
    %s204 = sphi 0, %s203
    %s218 = sphi 0, %s204
    %s224 = sphi 0, %s226
    %s227 = sphi 0, %s224
    %s228 = sphi 0, %s227
    %s244 = sphi 0, %s228
  $region4: #{upblock_forward.1} parent=0 // loop_header_branch
    %18 = sbr.rel (%p16) target = $region8
  $region5: #{upblock_forward.1} parent=0 // loop_body
    %s20 = ssub.s32 %s15, 1
    %s21 = ssub.s32 %s15, 2
    %s22 = sadd.s32 %s15, 1
    %s23 = ssub.s32 %s15, %s22
    %p24 = scmp.eq.s32.totalorder %s23, 0
    %s26 = sadd.s32 %s25, 1
    %s27 = scalar_select %p24, %s25, %s26
    %p30 = pneg %p24
    %p31 = scmp.eq.s32.totalorder %s15, 1
    %p32 = por %p30, %p31
    %p33 = scmp.ne.s32.totalorder %s25, %s28
    %p34 = scmp.eq.s32.totalorder %s15, 0
    %p35 = por %p33, %p34
    %p36 = scmp.ne.s32.totalorder %s25, %s28
    %p37 = scmp.eq.s32.totalorder %s20, 1
    %p38 = por %p36, %p37
    %p39 = scmp.ne.s32.totalorder %s28, %s29
    %p40 = scmp.eq.s32.totalorder %s20, 0
    %p41 = por %p39, %p40
    %p42 = scmp.ne.s32.totalorder %s28, %s29
    %p43 = scmp.eq.s32.totalorder %s21, 1
    %p44 = por %p42, %p43
    %p46 = scmp.ne.s32.totalorder %s29, %s45
    %p47 = scmp.eq.s32.totalorder %s21, 0
    %p48 = por %p46, %p47
    %s49 = ssub.s32 %s15, %s22
    %p50 = scmp.eq.s32.totalorder %s49, 0
    %s52 = sadd.s32 %s51, 1
    %s53 = scalar_select %p50, %s51, %s52
    %p56 = pneg %p50
    %p57 = scmp.eq.s32.totalorder %s15, 1
    %p58 = por %p56, %p57
    %p59 = scmp.ne.s32.totalorder %s51, %s54
    %p60 = scmp.eq.s32.totalorder %s15, 0
    %p61 = por %p59, %p60
    %p62 = scmp.ne.s32.totalorder %s51, %s54
    %p63 = scmp.eq.s32.totalorder %s20, 1
    %p64 = por %p62, %p63
    %p65 = scmp.ne.s32.totalorder %s54, %s55
    %p66 = scmp.eq.s32.totalorder %s20, 0
    %p67 = por %p65, %p66
    %p68 = scmp.ne.s32.totalorder %s54, %s55
    %p69 = scmp.eq.s32.totalorder %s21, 1
    %p70 = por %p68, %p69
    %p72 = scmp.ne.s32.totalorder %s55, %s71
    %p73 = scmp.eq.s32.totalorder %s21, 0
    %p74 = por %p72, %p73
    %s76 = sadd.s32 %s75, 1
    %p79 = scmp.eq.s32.totalorder %s15, 1
    %p80 = scmp.ne.s32.totalorder %s75, %s77
    %p81 = scmp.eq.s32.totalorder %s15, 0
    %p82 = por %p80, %p81
    %p83 = scmp.ne.s32.totalorder %s75, %s77
    %p84 = scmp.eq.s32.totalorder %s20, 1
    %p85 = por %p83, %p84
    %p86 = scmp.ne.s32.totalorder %s77, %s78
    %p87 = scmp.eq.s32.totalorder %s20, 0
    %p88 = por %p86, %p87
    %p89 = scmp.ne.s32.totalorder %s77, %s78
    %p90 = scmp.eq.s32.totalorder %s21, 1
    %p91 = por %p89, %p90
    %p93 = scmp.ne.s32.totalorder %s78, %s92
    %p94 = scmp.eq.s32.totalorder %s21, 0
    %p95 = por %p93, %p94
    %s97 = sadd.s32 %s96, 1
    %p100 = scmp.eq.s32.totalorder %s15, 1
    %p101 = scmp.ne.s32.totalorder %s96, %s98
    %p102 = scmp.eq.s32.totalorder %s15, 0
    %p103 = por %p101, %p102
    %p104 = scmp.ne.s32.totalorder %s96, %s98
    %p105 = scmp.eq.s32.totalorder %s20, 1
    %p106 = por %p104, %p105
    %p107 = scmp.ne.s32.totalorder %s98, %s99
    %p108 = scmp.eq.s32.totalorder %s20, 0
    %p109 = por %p107, %p108
    %p110 = scmp.ne.s32.totalorder %s98, %s99
    %p111 = scmp.eq.s32.totalorder %s21, 1
    %p112 = por %p110, %p111
    %p114 = scmp.ne.s32.totalorder %s99, %s113
    %p115 = scmp.eq.s32.totalorder %s21, 0
    %p116 = por %p114, %p115
    %s118 = sadd.s32 %s117, 1
    %p121 = scmp.eq.s32.totalorder %s15, 1
    %p122 = scmp.ne.s32.totalorder %s117, %s119
    %p123 = scmp.eq.s32.totalorder %s15, 0
    %p124 = por %p122, %p123
    %p125 = scmp.ne.s32.totalorder %s117, %s119
    %p126 = scmp.eq.s32.totalorder %s20, 1
    %p127 = por %p125, %p126
    %p128 = scmp.ne.s32.totalorder %s119, %s120
    %p129 = scmp.eq.s32.totalorder %s20, 0
    %p130 = por %p128, %p129
    %p131 = scmp.ne.s32.totalorder %s119, %s120
    %p132 = scmp.eq.s32.totalorder %s21, 1
    %p133 = por %p131, %p132
    %p135 = scmp.ne.s32.totalorder %s120, %s134
    %p136 = scmp.eq.s32.totalorder %s21, 0
    %p137 = por %p135, %p136
    %s139 = sadd.s32 %s138, 1
    %p142 = scmp.eq.s32.totalorder %s15, 1
    %p143 = scmp.ne.s32.totalorder %s138, %s140
    %p144 = scmp.eq.s32.totalorder %s15, 0
    %p145 = por %p143, %p144
    %p146 = scmp.ne.s32.totalorder %s138, %s140
    %p147 = scmp.eq.s32.totalorder %s20, 1
    %p148 = por %p146, %p147
    %p149 = scmp.ne.s32.totalorder %s140, %s141
    %p150 = scmp.eq.s32.totalorder %s20, 0
    %p151 = por %p149, %p150
    %p152 = scmp.ne.s32.totalorder %s140, %s141
    %p153 = scmp.eq.s32.totalorder %s21, 1
    %p154 = por %p152, %p153
    %p156 = scmp.ne.s32.totalorder %s141, %s155
    %p157 = scmp.eq.s32.totalorder %s21, 0
    %p158 = por %p156, %p157
    %s160 = sadd.s32 %s159, 1
    %p163 = scmp.eq.s32.totalorder %s15, 1
    %p164 = scmp.ne.s32.totalorder %s159, %s161
    %p165 = scmp.eq.s32.totalorder %s15, 0
    %p166 = por %p164, %p165
    %p167 = scmp.ne.s32.totalorder %s159, %s161
    %p168 = scmp.eq.s32.totalorder %s20, 1
    %p169 = por %p167, %p168
    %p170 = scmp.ne.s32.totalorder %s161, %s162
    %p171 = scmp.eq.s32.totalorder %s20, 0
    %p172 = por %p170, %p171
    %p173 = scmp.ne.s32.totalorder %s161, %s162
    %p174 = scmp.eq.s32.totalorder %s21, 1
    %p175 = por %p173, %p174
    %p177 = scmp.ne.s32.totalorder %s162, %s176
    %p178 = scmp.eq.s32.totalorder %s21, 0
    %p179 = por %p177, %p178
    %s181 = sadd.s32 %s180, 1
    %p184 = scmp.eq.s32.totalorder %s15, 1
    %p185 = scmp.ne.s32.totalorder %s180, %s182
    %p186 = scmp.eq.s32.totalorder %s15, 0
    %p187 = por %p185, %p186
    %p188 = scmp.ne.s32.totalorder %s180, %s182
    %p189 = scmp.eq.s32.totalorder %s20, 1
    %p190 = por %p188, %p189
    %p191 = scmp.ne.s32.totalorder %s182, %s183
    %p192 = scmp.eq.s32.totalorder %s20, 0
    %p193 = por %p191, %p192
    %p194 = scmp.ne.s32.totalorder %s182, %s183
    %p195 = scmp.eq.s32.totalorder %s21, 1
    %p196 = por %p194, %p195
    %p198 = scmp.ne.s32.totalorder %s183, %s197
    %p199 = scmp.eq.s32.totalorder %s21, 0
    %p200 = por %p198, %p199
    %s202 = sadd.s32 %s201, 1
    %p205 = scmp.eq.s32.totalorder %s15, 1
    %p206 = scmp.ne.s32.totalorder %s201, %s203
    %p207 = scmp.eq.s32.totalorder %s15, 0
    %p208 = por %p206, %p207
    %p209 = scmp.ne.s32.totalorder %s201, %s203
    %p210 = scmp.eq.s32.totalorder %s20, 1
    %p211 = por %p209, %p210
    %p212 = scmp.ne.s32.totalorder %s203, %s204
    %p213 = scmp.eq.s32.totalorder %s20, 0
    %p214 = por %p212, %p213
    %p215 = scmp.ne.s32.totalorder %s203, %s204
    %p216 = scmp.eq.s32.totalorder %s21, 1
    %p217 = por %p215, %p216
    %p219 = scmp.ne.s32.totalorder %s204, %s218
    %p220 = scmp.eq.s32.totalorder %s21, 0
    %p221 = por %p219, %p220
    %s222 = ssub.s32 %s15, %s22
    %p223 = scmp.eq.s32.totalorder %s222, 0
    %s225 = sadd.s32 %s224, 1
    %s226 = scalar_select %p223, %s224, %s225
    %p229 = pneg %p223
    %p230 = scmp.eq.s32.totalorder %s15, 1
    %p231 = por %p229, %p230
    %p232 = scmp.ne.s32.totalorder %s224, %s227
    %p233 = scmp.eq.s32.totalorder %s15, 0
    %p234 = por %p232, %p233
    %p235 = scmp.ne.s32.totalorder %s224, %s227
    %p236 = scmp.eq.s32.totalorder %s20, 1
    %p237 = por %p235, %p236
    %p238 = scmp.ne.s32.totalorder %s227, %s228
    %p239 = scmp.eq.s32.totalorder %s20, 0
    %p240 = por %p238, %p239
    %p241 = scmp.ne.s32.totalorder %s227, %s228
    %p242 = scmp.eq.s32.totalorder %s21, 1
    %p243 = por %p241, %p242
    %p245 = scmp.ne.s32.totalorder %s228, %s244
    %p246 = scmp.eq.s32.totalorder %s21, 0
    %p247 = por %p245, %p246
    %p248 = scmp.le.s32.totalorder 1, %s15
    %p249 = scmp.lt.s32.totalorder %s15, 3
    %p250 = pnand %p248, %p249
    %p251 = pneg %p250
    // Predicated region
    $region9: #{upblock_forward.1} parent=5 // pred_check
      _
    $region10: #{upblock_forward.1} parent=5 // pred_check_branch
      %253 = sbr.rel (%p250) target = $region12
    $region11: #{upblock_forward.1} parent=5 // pred_region
      %s254 = ssub.s32 %s15, 1
      // Predicated region
      $region13: #{upblock_forward.1} parent=11 // pred_check
        %p255 = pneg %p88
      $region14: #{upblock_forward.1} parent=11 // pred_check_branch
        %257 = sbr.rel (%p255) target = $region16
      $region15: #{upblock_forward.1} parent=11 // pred_region
        _
      $region16: #{upblock_forward.1} parent=11 // pred_fallthru
        _
      // Predicated region
      $region17: #{upblock_forward.1} parent=11 // pred_check
        %p258 = pneg %p109
      $region18: #{upblock_forward.1} parent=11 // pred_check_branch
        %260 = sbr.rel (%p258) target = $region20
      $region19: #{upblock_forward.1} parent=11 // pred_region
        _
      $region20: #{upblock_forward.1} parent=11 // pred_fallthru
        _
      // Predicated region
      $region21: #{upblock_forward.1} parent=11 // pred_check
        %p261 = pneg %p130
      $region22: #{upblock_forward.1} parent=11 // pred_check_branch
        %263 = sbr.rel (%p261) target = $region24
      $region23: #{upblock_forward.1} parent=11 // pred_region
        _
      $region24: #{upblock_forward.1} parent=11 // pred_fallthru
        _
      // Predicated region
      $region25: #{upblock_forward.1} parent=11 // pred_check
        %p264 = pneg %p151
      $region26: #{upblock_forward.1} parent=11 // pred_check_branch
        %266 = sbr.rel (%p264) target = $region28
      $region27: #{upblock_forward.1} parent=11 // pred_region
        _
      $region28: #{upblock_forward.1} parent=11 // pred_fallthru
        _
      // Predicated region
      $region29: #{upblock_forward.1} parent=11 // pred_check
        %p267 = pneg %p172
      $region30: #{upblock_forward.1} parent=11 // pred_check_branch
        %269 = sbr.rel (%p267) target = $region32
      $region31: #{upblock_forward.1} parent=11 // pred_region
        _
      $region32: #{upblock_forward.1} parent=11 // pred_fallthru
        _
      // Predicated region
      $region33: #{upblock_forward.1} parent=11 // pred_check
        %p270 = pneg %p193
      $region34: #{upblock_forward.1} parent=11 // pred_check_branch
        %272 = sbr.rel (%p270) target = $region36
      $region35: #{upblock_forward.1} parent=11 // pred_region
        _
      $region36: #{upblock_forward.1} parent=11 // pred_fallthru
        _
      // Predicated region
      $region37: #{upblock_forward.1} parent=11 // pred_check
        %p273 = pneg %p214
      $region38: #{upblock_forward.1} parent=11 // pred_check_branch
        %275 = sbr.rel (%p273) target = $region40
      $region39: #{upblock_forward.1} parent=11 // pred_region
        _
      $region40: #{upblock_forward.1} parent=11 // pred_fallthru
        _
    $region12: #{upblock_forward.1} parent=5 // pred_fallthru
      _
    %p276 = scmp.lt.s32.totalorder %s15, 2
    // Predicated region
    $region41: #{upblock_forward.1} parent=5 // pred_check
      %p277 = pneg %p276
    $region42: #{upblock_forward.1} parent=5 // pred_check_branch
      %279 = sbr.rel (%p277) target = $region44
    $region43: #{upblock_forward.1} parent=5 // pred_region
      // Predicated region
      $region45: #{upblock_forward.1} parent=43 // pred_check
        %p280 = pneg %p35
      $region46: #{upblock_forward.1} parent=43 // pred_check_branch
        %282 = sbr.rel (%p280) target = $region48
      $region47: #{upblock_forward.1} parent=43 // pred_region
        %p283 = scmp.lt.s32.totalorder %s15, 1
        %s284 = scalar_select %p283, %s15, 1
        %s285 = smul.addr %s284, 2
        %s286 = smul.addr %s285, 8
        %s287 = scalar_lea.vmem %s0, %s286
      $region48: #{upblock_forward.1} parent=43 // pred_fallthru
        _
      // Predicated region
      $region49: #{upblock_forward.1} parent=43 // pred_check
        %p288 = pneg %p61
      $region50: #{upblock_forward.1} parent=43 // pred_check_branch
        %290 = sbr.rel (%p288) target = $region52
      $region51: #{upblock_forward.1} parent=43 // pred_region
        %p291 = scmp.lt.s32.totalorder %s15, 1
        %s292 = scalar_select %p291, %s15, 1
        %s293 = smul.addr %s292, 2
        %s294 = smul.addr %s293, 8
        %s295 = scalar_lea.vmem %s1, %s294
      $region52: #{upblock_forward.1} parent=43 // pred_fallthru
        _
    $region44: #{upblock_forward.1} parent=5 // pred_fallthru
      _
    %p296 = scmp.le.s32.totalorder 1, %s15
    %p297 = scmp.lt.s32.totalorder %s15, 3
    %p298 = pnand %p296, %p297
    %p299 = pneg %p298
    // Predicated region
    $region53: #{upblock_forward.1} parent=5 // pred_check
      _
    $region54: #{upblock_forward.1} parent=5 // pred_check_branch
      %301 = sbr.rel (%p298) target = $region56
    $region55: #{upblock_forward.1} parent=5 // pred_region
      %s302 = ssub.s32 %s15, 1
      %p303 = scmp.lt.s32.totalorder %s20, 1
      %s304 = scalar_select %p303, %s20, 1
      %s305 = smul.addr %s304, 2
      %s306 = smul.addr %s305, 8
      %s307 = scalar_lea.vmem %s0, %s306
      %p308 = pneg %p41
      %p309 = pneg %p38
      %p310 = scmp.lt.s32.totalorder %s20, 1
      %s311 = scalar_select %p310, %s20, 1
      %s312 = smul.addr %s311, 2
      %s313 = smul.addr %s312, 8
      %s314 = scalar_lea.vmem %s1, %s313
      %p315 = pneg %p67
      %p316 = pneg %p64
      %p317 = pneg %p88
      %p318 = pneg %p85
      %p319 = pneg %p109
      %p320 = pneg %p106
      %p321 = pneg %p130
      %p322 = pneg %p127
      %p323 = pneg %p151
      %p324 = pneg %p148
      %p325 = pneg %p172
      %p326 = pneg %p169
      %p327 = pneg %p193
      %p328 = pneg %p190
      %p329 = pneg %p214
      %p330 = pneg %p211
      %p331 = pneg %p240
      %p332 = pneg %p237
      %p333 = scmp.lt.s32.totalorder %s20, 1
      %s334 = scalar_select %p333, %s20, 1
      %s335 = smul.addr %s334, 4
      %s336 = smul.addr %s335, 8
      %s337 = scalar_lea.vmem %s9, %s336
      %p338 = scmp.lt.s32.totalorder %s20, 1
      %s339 = scalar_select %p338, %s20, 1
      %s340 = smul.addr %s339, 2
      %s341 = smul.addr %s340, 8
      %s342 = scalar_lea.vmem %s0, %s341
      %p343 = scmp.lt.s32.totalorder %s20, 1
      %s344 = scalar_select %p343, %s20, 1
      %s345 = smul.addr %s344, 2
      %s346 = smul.addr %s345, 8
      %s347 = scalar_lea.vmem %s1, %s346
      %p348 = scmp.lt.s32.totalorder %s20, 1
      %s349 = scalar_select %p348, %s20, 1
      %s350 = smul.addr %s349, 4
      %s351 = smul.addr %s350, 8
      %s352 = scalar_lea.vmem %s9, %s351
      %v353 = vld [vmem:[%s342] sm:$0xff]
      %v354 = vld [vmem:[%s342 + $0x8] sm:$0xff]
      %v355 = vld [vmem:[%s347] sm:$0xff]
      %v356 = vld [vmem:[%s347 + $0x8] sm:$0xff]
      %v357 = vld [vmem:[%s2] sm:$0xff]
      %v358 = vld [vmem:[%s2 + $0x8] sm:$0xff]
      %v359 = vld [vmem:[%s2 + $0x10] sm:$0xff]
      %v360 = vld [vmem:[%s2 + $0x18] sm:$0xff]
      %v361 = vld [vmem:[%s2 + $0x20] sm:$0xff]
      %v362 = vld [vmem:[%s2 + $0x28] sm:$0xff]
      %v363 = vld [vmem:[%s2 + $0x30] sm:$0xff]
      %v364 = vld [vmem:[%s2 + $0x38] sm:$0xff]
      %v365 = vld [vmem:[%s2 + $0x40] sm:$0xff]
      %v366 = vld [vmem:[%s2 + $0x48] sm:$0xff]
      %v367 = vld [vmem:[%s2 + $0x50] sm:$0xff]
      %v368 = vld [vmem:[%s2 + $0x58] sm:$0xff]
      %v369 = vld [vmem:[%s2 + $0x60] sm:$0xff]
      %v370 = vld [vmem:[%s2 + $0x68] sm:$0xff]
      %v371 = vld [vmem:[%s2 + $0x70] sm:$0xff]
      %v372 = vld [vmem:[%s2 + $0x78] sm:$0xff]
      %v373 = vld [vmem:[%s3] sm:$0xff]
      %v374 = vld [vmem:[%s3 + $0x8] sm:$0xff]
      %v375 = vld [vmem:[%s3 + $0x10] sm:$0xff]
      %v376 = vld [vmem:[%s3 + $0x18] sm:$0xff]
      %v377 = vld [vmem:[%s3 + $0x20] sm:$0xff]
      %v378 = vld [vmem:[%s3 + $0x28] sm:$0xff]
      %v379 = vld [vmem:[%s3 + $0x30] sm:$0xff]
      %v380 = vld [vmem:[%s3 + $0x38] sm:$0xff]
      %v381 = vld [vmem:[%s3 + $0x40] sm:$0xff]
      %v382 = vld [vmem:[%s3 + $0x48] sm:$0xff]
      %v383 = vld [vmem:[%s3 + $0x50] sm:$0xff]
      %v384 = vld [vmem:[%s3 + $0x58] sm:$0xff]
      %v385 = vld [vmem:[%s3 + $0x60] sm:$0xff]
      %v386 = vld [vmem:[%s3 + $0x68] sm:$0xff]
      %v387 = vld [vmem:[%s3 + $0x70] sm:$0xff]
      %v388 = vld [vmem:[%s3 + $0x78] sm:$0xff]
      %v389 = vld [vmem:[%s3 + $0x80] sm:$0xff]
      %v390 = vld [vmem:[%s3 + $0x88] sm:$0xff]
      %v391 = vld [vmem:[%s3 + $0x90] sm:$0xff]
      %v392 = vld [vmem:[%s3 + $0x98] sm:$0xff]
      %v393 = vld [vmem:[%s3 + $0xa0] sm:$0xff]
      %v394 = vld [vmem:[%s3 + $0xa8] sm:$0xff]
      %v395 = vld [vmem:[%s3 + $0xb0] sm:$0xff]
      %v396 = vld [vmem:[%s3 + $0xb8] sm:$0xff]
      %v397 = vld [vmem:[%s3 + $0xc0] sm:$0xff]
      %v398 = vld [vmem:[%s3 + $0xc8] sm:$0xff]
      %v399 = vld [vmem:[%s3 + $0xd0] sm:$0xff]
      %v400 = vld [vmem:[%s3 + $0xd8] sm:$0xff]
      %v401 = vld [vmem:[%s3 + $0xe0] sm:$0xff]
      %v402 = vld [vmem:[%s3 + $0xe8] sm:$0xff]
      %v403 = vld [vmem:[%s3 + $0xf0] sm:$0xff]
      %v404 = vld [vmem:[%s3 + $0xf8] sm:$0xff]
      %405 = vmatprep.subr.mxu0 %v404
      %406 = vmatpush1.msra.mxu0 %v403
      %407 = vmatprep.subr.mxu0 %v402
      %408 = vmatpush1.msra.mxu0 %v401
      %409 = vmatprep.subr.mxu0 %v400
      %410 = vmatpush1.msra.mxu0 %v399
      %411 = vmatprep.subr.mxu0 %v398
      %412 = vmatpush1.msra.mxu0 %v397
      %413 = vmatprep.subr.mxu0 %v396
      %414 = vmatpush1.msra.mxu0 %v395
      %415 = vmatprep.subr.mxu0 %v394
      %416 = vmatpush1.msra.mxu0 %v393
      %417 = vmatprep.subr.mxu0 %v392
      %418 = vmatpush1.msra.mxu0 %v391
      %419 = vmatprep.subr.mxu0 %v390
      %420 = vmatpush1.msra.mxu0 %v389
      %421 = vmatprep.subr.mxu0 %v388
      %422 = vmatpush1.msra.mxu0 %v387
      %423 = vmatprep.subr.mxu0 %v386
      %424 = vmatpush1.msra.mxu0 %v385
      %425 = vmatprep.subr.mxu0 %v384
      %426 = vmatpush1.msra.mxu0 %v383
      %427 = vmatprep.subr.mxu0 %v382
      %428 = vmatpush1.msra.mxu0 %v381
      %429 = vmatprep.subr.mxu0 %v380
      %430 = vmatpush1.msra.mxu0 %v379
      %431 = vmatprep.subr.mxu0 %v378
      %432 = vmatpush1.msra.mxu0 %v377
      %433 = vmatprep.subr.mxu0 %v376
      %434 = vmatpush1.msra.mxu0 %v375
      %435 = vmatprep.subr.mxu0 %v374
      %436 = vmatpush1.msra.mxu0 %v373
      %437 = vmatprep.subr.mxu0 0.0
      %438 = vmatpush2.msra.mxu0 0.0
      %439 = vmatprep.subr.mxu0 0.0
      %440 = vmatpush2.msra.mxu0 0.0
      %441 = vmatprep.subr.mxu0 0.0
      %442 = vmatpush2.msra.mxu0 0.0
      %443 = vmatprep.subr.mxu0 0.0
      %444 = vmatpush2.msra.mxu0 0.0
      %445 = vmatprep.subr.mxu0 0.0
      %446 = vmatpush2.msra.mxu0 0.0
      %447 = vmatprep.subr.mxu0 0.0
      %448 = vmatpush2.msra.mxu0 0.0
      %449 = vmatprep.subr.mxu0 0.0
      %450 = vmatpush2.msra.mxu0 0.0
      %451 = vmatprep.subr.mxu0 0.0
      %452 = vmatpush2.msra.mxu0 0.0
      %453 = vmatprep.subr.mxu0 0.0
      %454 = vmatpush2.msra.mxu0 0.0
      %455 = vmatprep.subr.mxu0 0.0
      %456 = vmatpush2.msra.mxu0 0.0
      %457 = vmatprep.subr.mxu0 0.0
      %458 = vmatpush2.msra.mxu0 0.0
      %459 = vmatprep.subr.mxu0 0.0
      %460 = vmatpush2.msra.mxu0 0.0
      %461 = vmatprep.subr.mxu0 0.0
      %462 = vmatpush2.msra.mxu0 0.0
      %463 = vmatprep.subr.mxu0 0.0
      %464 = vmatpush2.msra.mxu0 0.0
      %465 = vmatprep.subr.mxu0 0.0
      %466 = vmatpush2.msra.mxu0 0.0
      %467 = vmatprep.subr.mxu0 0.0
      %468 = vmatpush2.msra.mxu0 0.0
      %469 = vmatprep.mubr.f32.mxu0 0.0
      %470 = vmatmul.mubr.f32.gmra.mxu0 %v355
      %v471 = vpop.f32.mrf.mxu0
      %v472 = vadd.f32 0.0, %v471
      %v473 = vpop.f32.mrf.mxu0
      %v474 = vadd.f32 0.0, %v473
      %475 = vmatprep.mubr.f32.mxu0 0.0
      %476 = vmatmul.mubr.f32.gmra.mxu0 %v356
      %v477 = vpop.f32.mrf.mxu0
      %v478 = vadd.f32 0.0, %v477
      %v479 = vpop.f32.mrf.mxu0
      %v480 = vadd.f32 0.0, %v479
      %481 = vdwg.mxu0
      %vm482 = vcmask 523264
      %v484 = vsel %vm482, %v353, 0
      %v487 = vsel %vm482, %v354, 0
      %489 = vmatprep.subr.mxu0 0.0
      %490 = vmatpush1.msra.mxu0 0.0
      %491 = vmatprep.subr.mxu0 0.0
      %492 = vmatpush1.msra.mxu0 0.0
      %493 = vmatprep.subr.mxu0 0.0
      %494 = vmatpush1.msra.mxu0 0.0
      %495 = vmatprep.subr.mxu0 0.0
      %496 = vmatpush1.msra.mxu0 0.0
      %497 = vmatprep.subr.mxu0 0.0
      %498 = vmatpush1.msra.mxu0 0.0
      %499 = vmatprep.subr.mxu0 0.0
      %500 = vmatpush1.msra.mxu0 0.0
      %501 = vmatprep.subr.mxu0 0.0
      %502 = vmatpush1.msra.mxu0 0.0
      %503 = vmatprep.subr.mxu0 0.0
      %504 = vmatpush1.msra.mxu0 0.0
      %505 = vmatprep.subr.mxu0 %v372
      %506 = vmatpush1.msra.mxu0 %v371
      %507 = vmatprep.subr.mxu0 %v370
      %508 = vmatpush1.msra.mxu0 %v369
      %509 = vmatprep.subr.mxu0 %v368
      %510 = vmatpush1.msra.mxu0 %v367
      %511 = vmatprep.subr.mxu0 %v366
      %512 = vmatpush1.msra.mxu0 %v365
      %513 = vmatprep.subr.mxu0 %v364
      %514 = vmatpush1.msra.mxu0 %v363
      %515 = vmatprep.subr.mxu0 %v362
      %516 = vmatpush1.msra.mxu0 %v361
      %517 = vmatprep.subr.mxu0 %v360
      %518 = vmatpush1.msra.mxu0 %v359
      %519 = vmatprep.subr.mxu0 %v358
      %520 = vmatpush1.msra.mxu0 %v357
      %521 = vmatprep.subr.mxu0 0.0
      %522 = vmatpush2.msra.mxu0 0.0
      %523 = vmatprep.subr.mxu0 0.0
      %524 = vmatpush2.msra.mxu0 0.0
      %525 = vmatprep.subr.mxu0 0.0
      %526 = vmatpush2.msra.mxu0 0.0
      %527 = vmatprep.subr.mxu0 0.0
      %528 = vmatpush2.msra.mxu0 0.0
      %529 = vmatprep.subr.mxu0 0.0
      %530 = vmatpush2.msra.mxu0 0.0
      %531 = vmatprep.subr.mxu0 0.0
      %532 = vmatpush2.msra.mxu0 0.0
      %533 = vmatprep.subr.mxu0 0.0
      %534 = vmatpush2.msra.mxu0 0.0
      %535 = vmatprep.subr.mxu0 0.0
      %536 = vmatpush2.msra.mxu0 0.0
      %537 = vmatprep.subr.mxu0 0.0
      %538 = vmatpush2.msra.mxu0 0.0
      %539 = vmatprep.subr.mxu0 0.0
      %540 = vmatpush2.msra.mxu0 0.0
      %541 = vmatprep.subr.mxu0 0.0
      %542 = vmatpush2.msra.mxu0 0.0
      %543 = vmatprep.subr.mxu0 0.0
      %544 = vmatpush2.msra.mxu0 0.0
      %545 = vmatprep.subr.mxu0 0.0
      %546 = vmatpush2.msra.mxu0 0.0
      %547 = vmatprep.subr.mxu0 0.0
      %548 = vmatpush2.msra.mxu0 0.0
      %549 = vmatprep.subr.mxu0 0.0
      %550 = vmatpush2.msra.mxu0 0.0
      %551 = vmatprep.subr.mxu0 0.0
      %552 = vmatpush2.msra.mxu0 0.0
      %553 = vmatprep.mubr.f32.mxu0 0.0
      %554 = vmatmul.mubr.f32.gmra.mxu0 %v484
      %v555 = vpop.f32.mrf.mxu0
      %v556 = vadd.f32 %v472, %v555
      %v557 = vpop.f32.mrf.mxu0
      %v558 = vadd.f32 %v474, %v557
      %559 = vmatprep.mubr.f32.mxu0 0.0
      %560 = vmatmul.mubr.f32.gmra.mxu0 %v487
      %v561 = vpop.f32.mrf.mxu0
      %v562 = vadd.f32 %v478, %v561
      %v563 = vpop.f32.mrf.mxu0
      %v564 = vadd.f32 %v480, %v563
      %565 = vdwg.mxu0
      %v566 = vld [vmem:[%s4] sm:$0x3]
      %v568 = vlaneseq
      %v569 = vshrl.u32 %v568, 7
      %v570 = vsub.s32 0, %v569
      %v571 = vrot.slane %v566, %v570
      %v572 = vlaneseq
      %v573 = vshrl.u32 %v572, 7
      %v574 = vsub.s32 1, %v573
      %v575 = vrot.slane %v566, %v574
      %v578 = vadd.f32 %v556, %v571
      %v579 = vadd.f32 %v558, %v575
      %v580 = vadd.f32 %v562, %v571
      %v581 = vadd.f32 %v564, %v575
      %vm584 = vcmask 1040384
      %v585 = vrot.slane %v579, 7
      %v586 = vrot.slane %v581, 7
      %v587 = vsel %vm584, %v585, %v586
      %v590 = vsel %vm584, 0.0, %v585
      %vm593 = vcmask 1046528
      %v594 = vrot.slane %v578, 1
      %v595 = vrot.slane %v580, 1
      %v596 = vsel %vm593, %v594, %v595
      %v599 = vsel %vm593, %v595, 0.0
      %v600 = vld [vmem:[%s5] sm:$0xff]
      %v601 = vld [vmem:[%s5 + $0x8] sm:$0xff]
      %v602 = vld [vmem:[%s5 + $0x10] sm:$0xff]
      %v603 = vld [vmem:[%s5 + $0x18] sm:$0xff]
      %v604 = vld [vmem:[%s5 + $0x20] sm:$0xff]
      %v605 = vld [vmem:[%s5 + $0x28] sm:$0xff]
      %v606 = vld [vmem:[%s5 + $0x30] sm:$0xff]
      %v607 = vld [vmem:[%s5 + $0x38] sm:$0xff]
      %v608 = vld [vmem:[%s5 + $0x40] sm:$0xff]
      %v609 = vld [vmem:[%s5 + $0x48] sm:$0xff]
      %v610 = vld [vmem:[%s5 + $0x50] sm:$0xff]
      %v611 = vld [vmem:[%s5 + $0x58] sm:$0xff]
      %v612 = vld [vmem:[%s5 + $0x60] sm:$0xff]
      %v613 = vld [vmem:[%s5 + $0x68] sm:$0xff]
      %v614 = vld [vmem:[%s5 + $0x70] sm:$0xff]
      %v615 = vld [vmem:[%s5 + $0x78] sm:$0xff]
      %s616 = scalar_lea.vmem %s5, 128
      %v617 = vld [vmem:[%s616] sm:$0xff]
      %v618 = vld [vmem:[%s616 + $0x8] sm:$0xff]
      %v619 = vld [vmem:[%s616 + $0x10] sm:$0xff]
      %v620 = vld [vmem:[%s616 + $0x18] sm:$0xff]
      %v621 = vld [vmem:[%s616 + $0x20] sm:$0xff]
      %v622 = vld [vmem:[%s616 + $0x28] sm:$0xff]
      %v623 = vld [vmem:[%s616 + $0x30] sm:$0xff]
      %v624 = vld [vmem:[%s616 + $0x38] sm:$0xff]
      %v625 = vld [vmem:[%s616 + $0x40] sm:$0xff]
      %v626 = vld [vmem:[%s616 + $0x48] sm:$0xff]
      %v627 = vld [vmem:[%s616 + $0x50] sm:$0xff]
      %v628 = vld [vmem:[%s616 + $0x58] sm:$0xff]
      %v629 = vld [vmem:[%s616 + $0x60] sm:$0xff]
      %v630 = vld [vmem:[%s616 + $0x68] sm:$0xff]
      %v631 = vld [vmem:[%s616 + $0x70] sm:$0xff]
      %v632 = vld [vmem:[%s616 + $0x78] sm:$0xff]
      %633 = vmatprep.subr.mxu0 0.0
      %634 = vmatpush1.msra.mxu0 %v632
      %635 = vmatprep.subr.mxu0 0.0
      %636 = vmatpush1.msra.mxu0 %v631
      %637 = vmatprep.subr.mxu0 0.0
      %638 = vmatpush1.msra.mxu0 %v630
      %639 = vmatprep.subr.mxu0 0.0
      %640 = vmatpush1.msra.mxu0 %v629
      %641 = vmatprep.subr.mxu0 0.0
      %642 = vmatpush1.msra.mxu0 %v628
      %643 = vmatprep.subr.mxu0 0.0
      %644 = vmatpush1.msra.mxu0 %v627
      %645 = vmatprep.subr.mxu0 0.0
      %646 = vmatpush1.msra.mxu0 %v626
      %647 = vmatprep.subr.mxu0 0.0
      %648 = vmatpush1.msra.mxu0 %v625
      %649 = vmatprep.subr.mxu0 0.0
      %650 = vmatpush1.msra.mxu0 %v624
      %651 = vmatprep.subr.mxu0 0.0
      %652 = vmatpush1.msra.mxu0 %v623
      %653 = vmatprep.subr.mxu0 0.0
      %654 = vmatpush1.msra.mxu0 %v622
      %655 = vmatprep.subr.mxu0 0.0
      %656 = vmatpush1.msra.mxu0 %v621
      %657 = vmatprep.subr.mxu0 0.0
      %658 = vmatpush1.msra.mxu0 %v620
      %659 = vmatprep.subr.mxu0 0.0
      %660 = vmatpush1.msra.mxu0 %v619
      %661 = vmatprep.subr.mxu0 0.0
      %662 = vmatpush1.msra.mxu0 %v618
      %663 = vmatprep.subr.mxu0 0.0
      %664 = vmatpush1.msra.mxu0 %v617
      %665 = vmatprep.subr.mxu0 0.0
      %666 = vmatpush2.msra.mxu0 0.0
      %667 = vmatprep.subr.mxu0 0.0
      %668 = vmatpush2.msra.mxu0 0.0
      %669 = vmatprep.subr.mxu0 0.0
      %670 = vmatpush2.msra.mxu0 0.0
      %671 = vmatprep.subr.mxu0 0.0
      %672 = vmatpush2.msra.mxu0 0.0
      %673 = vmatprep.subr.mxu0 0.0
      %674 = vmatpush2.msra.mxu0 0.0
      %675 = vmatprep.subr.mxu0 0.0
      %676 = vmatpush2.msra.mxu0 0.0
      %677 = vmatprep.subr.mxu0 0.0
      %678 = vmatpush2.msra.mxu0 0.0
      %679 = vmatprep.subr.mxu0 0.0
      %680 = vmatpush2.msra.mxu0 0.0
      %681 = vmatprep.subr.mxu0 0.0
      %682 = vmatpush2.msra.mxu0 0.0
      %683 = vmatprep.subr.mxu0 0.0
      %684 = vmatpush2.msra.mxu0 0.0
      %685 = vmatprep.subr.mxu0 0.0
      %686 = vmatpush2.msra.mxu0 0.0
      %687 = vmatprep.subr.mxu0 0.0
      %688 = vmatpush2.msra.mxu0 0.0
      %689 = vmatprep.subr.mxu0 0.0
      %690 = vmatpush2.msra.mxu0 0.0
      %691 = vmatprep.subr.mxu0 0.0
      %692 = vmatpush2.msra.mxu0 0.0
      %693 = vmatprep.subr.mxu0 0.0
      %694 = vmatpush2.msra.mxu0 0.0
      %695 = vmatprep.subr.mxu0 0.0
      %696 = vmatpush2.msra.mxu0 0.0
      %697 = vmatprep.mubr.f32.mxu0 0.0
      %698 = vmatmul.mubr.f32.gmra.mxu0 %v578
      %v699 = vpop.f32.mrf.mxu0
      %v700 = vadd.f32 0.0, %v699
      %v701 = vpop.f32.mrf.mxu0
      %702 = vmatprep.mubr.f32.mxu0 0.0
      %703 = vmatmul.mubr.f32.gmra.mxu0 %v580
      %v704 = vpop.f32.mrf.mxu0
      %v705 = vadd.f32 0.0, %v704
      %v706 = vpop.f32.mrf.mxu0
      %707 = vmatprep.mubr.f32.mxu0 0.0
      %708 = vmatmul.mubr.f32.gmra.mxu0 %v579
      %v709 = vpop.f32.mrf.mxu0
      %v710 = vadd.f32 0.0, %v709
      %v711 = vpop.f32.mrf.mxu0
      %712 = vmatprep.mubr.f32.mxu0 0.0
      %713 = vmatmul.mubr.f32.gmra.mxu0 %v581
      %v714 = vpop.f32.mrf.mxu0
      %v715 = vadd.f32 0.0, %v714
      %v716 = vpop.f32.mrf.mxu0
      %717 = vdwg.mxu0
      %718 = vmatprep.subr.mxu0 0.0
      %719 = vmatpush1.msra.mxu0 %v615
      %720 = vmatprep.subr.mxu0 0.0
      %721 = vmatpush1.msra.mxu0 %v614
      %722 = vmatprep.subr.mxu0 0.0
      %723 = vmatpush1.msra.mxu0 %v613
      %724 = vmatprep.subr.mxu0 0.0
      %725 = vmatpush1.msra.mxu0 %v612
      %726 = vmatprep.subr.mxu0 0.0
      %727 = vmatpush1.msra.mxu0 %v611
      %728 = vmatprep.subr.mxu0 0.0
      %729 = vmatpush1.msra.mxu0 %v610
      %730 = vmatprep.subr.mxu0 0.0
      %731 = vmatpush1.msra.mxu0 %v609
      %732 = vmatprep.subr.mxu0 0.0
      %733 = vmatpush1.msra.mxu0 %v608
      %734 = vmatprep.subr.mxu0 0.0
      %735 = vmatpush1.msra.mxu0 %v607
      %736 = vmatprep.subr.mxu0 0.0
      %737 = vmatpush1.msra.mxu0 %v606
      %738 = vmatprep.subr.mxu0 0.0
      %739 = vmatpush1.msra.mxu0 %v605
      %740 = vmatprep.subr.mxu0 0.0
      %741 = vmatpush1.msra.mxu0 %v604
      %742 = vmatprep.subr.mxu0 0.0
      %743 = vmatpush1.msra.mxu0 %v603
      %744 = vmatprep.subr.mxu0 0.0
      %745 = vmatpush1.msra.mxu0 %v602
      %746 = vmatprep.subr.mxu0 0.0
      %747 = vmatpush1.msra.mxu0 %v601
      %748 = vmatprep.subr.mxu0 0.0
      %749 = vmatpush1.msra.mxu0 %v600
      %750 = vmatprep.subr.mxu0 0.0
      %751 = vmatpush2.msra.mxu0 0.0
      %752 = vmatprep.subr.mxu0 0.0
      %753 = vmatpush2.msra.mxu0 0.0
      %754 = vmatprep.subr.mxu0 0.0
      %755 = vmatpush2.msra.mxu0 0.0
      %756 = vmatprep.subr.mxu0 0.0
      %757 = vmatpush2.msra.mxu0 0.0
      %758 = vmatprep.subr.mxu0 0.0
      %759 = vmatpush2.msra.mxu0 0.0
      %760 = vmatprep.subr.mxu0 0.0
      %761 = vmatpush2.msra.mxu0 0.0
      %762 = vmatprep.subr.mxu0 0.0
      %763 = vmatpush2.msra.mxu0 0.0
      %764 = vmatprep.subr.mxu0 0.0
      %765 = vmatpush2.msra.mxu0 0.0
      %766 = vmatprep.subr.mxu0 0.0
      %767 = vmatpush2.msra.mxu0 0.0
      %768 = vmatprep.subr.mxu0 0.0
      %769 = vmatpush2.msra.mxu0 0.0
      %770 = vmatprep.subr.mxu0 0.0
      %771 = vmatpush2.msra.mxu0 0.0
      %772 = vmatprep.subr.mxu0 0.0
      %773 = vmatpush2.msra.mxu0 0.0
      %774 = vmatprep.subr.mxu0 0.0
      %775 = vmatpush2.msra.mxu0 0.0
      %776 = vmatprep.subr.mxu0 0.0
      %777 = vmatpush2.msra.mxu0 0.0
      %778 = vmatprep.subr.mxu0 0.0
      %779 = vmatpush2.msra.mxu0 0.0
      %780 = vmatprep.subr.mxu0 0.0
      %781 = vmatpush2.msra.mxu0 0.0
      %782 = vmatprep.mubr.f32.mxu0 0.0
      %783 = vmatmul.mubr.f32.gmra.mxu0 %v590
      %v784 = vpop.f32.mrf.mxu0
      %v785 = vadd.f32 %v700, %v784
      %v786 = vpop.f32.mrf.mxu0
      %787 = vmatprep.mubr.f32.mxu0 0.0
      %788 = vmatmul.mubr.f32.gmra.mxu0 %v587
      %v789 = vpop.f32.mrf.mxu0
      %v790 = vadd.f32 %v705, %v789
      %v791 = vpop.f32.mrf.mxu0
      %792 = vmatprep.mubr.f32.mxu0 0.0
      %793 = vmatmul.mubr.f32.gmra.mxu0 %v578
      %v794 = vpop.f32.mrf.mxu0
      %v795 = vadd.f32 %v710, %v794
      %v796 = vpop.f32.mrf.mxu0
      %797 = vmatprep.mubr.f32.mxu0 0.0
      %798 = vmatmul.mubr.f32.gmra.mxu0 %v580
      %v799 = vpop.f32.mrf.mxu0
      %v800 = vadd.f32 %v715, %v799
      %v801 = vpop.f32.mrf.mxu0
      %802 = vdwg.mxu0
      %s803 = scalar_lea.vmem %s5, 256
      %v804 = vld [vmem:[%s803] sm:$0xff]
      %v805 = vld [vmem:[%s803 + $0x8] sm:$0xff]
      %v806 = vld [vmem:[%s803 + $0x10] sm:$0xff]
      %v807 = vld [vmem:[%s803 + $0x18] sm:$0xff]
      %v808 = vld [vmem:[%s803 + $0x20] sm:$0xff]
      %v809 = vld [vmem:[%s803 + $0x28] sm:$0xff]
      %v810 = vld [vmem:[%s803 + $0x30] sm:$0xff]
      %v811 = vld [vmem:[%s803 + $0x38] sm:$0xff]
      %v812 = vld [vmem:[%s803 + $0x40] sm:$0xff]
      %v813 = vld [vmem:[%s803 + $0x48] sm:$0xff]
      %v814 = vld [vmem:[%s803 + $0x50] sm:$0xff]
      %v815 = vld [vmem:[%s803 + $0x58] sm:$0xff]
      %v816 = vld [vmem:[%s803 + $0x60] sm:$0xff]
      %v817 = vld [vmem:[%s803 + $0x68] sm:$0xff]
      %v818 = vld [vmem:[%s803 + $0x70] sm:$0xff]
      %v819 = vld [vmem:[%s803 + $0x78] sm:$0xff]
      %820 = vmatprep.subr.mxu0 0.0
      %821 = vmatpush1.msra.mxu0 %v819
      %822 = vmatprep.subr.mxu0 0.0
      %823 = vmatpush1.msra.mxu0 %v818
      %824 = vmatprep.subr.mxu0 0.0
      %825 = vmatpush1.msra.mxu0 %v817
      %826 = vmatprep.subr.mxu0 0.0
      %827 = vmatpush1.msra.mxu0 %v816
      %828 = vmatprep.subr.mxu0 0.0
      %829 = vmatpush1.msra.mxu0 %v815
      %830 = vmatprep.subr.mxu0 0.0
      %831 = vmatpush1.msra.mxu0 %v814
      %832 = vmatprep.subr.mxu0 0.0
      %833 = vmatpush1.msra.mxu0 %v813
      %834 = vmatprep.subr.mxu0 0.0
      %835 = vmatpush1.msra.mxu0 %v812
      %836 = vmatprep.subr.mxu0 0.0
      %837 = vmatpush1.msra.mxu0 %v811
      %838 = vmatprep.subr.mxu0 0.0
      %839 = vmatpush1.msra.mxu0 %v810
      %840 = vmatprep.subr.mxu0 0.0
      %841 = vmatpush1.msra.mxu0 %v809
      %842 = vmatprep.subr.mxu0 0.0
      %843 = vmatpush1.msra.mxu0 %v808
      %844 = vmatprep.subr.mxu0 0.0
      %845 = vmatpush1.msra.mxu0 %v807
      %846 = vmatprep.subr.mxu0 0.0
      %847 = vmatpush1.msra.mxu0 %v806
      %848 = vmatprep.subr.mxu0 0.0
      %849 = vmatpush1.msra.mxu0 %v805
      %850 = vmatprep.subr.mxu0 0.0
      %851 = vmatpush1.msra.mxu0 %v804
      %852 = vmatprep.subr.mxu0 0.0
      %853 = vmatpush2.msra.mxu0 0.0
      %854 = vmatprep.subr.mxu0 0.0
      %855 = vmatpush2.msra.mxu0 0.0
      %856 = vmatprep.subr.mxu0 0.0
      %857 = vmatpush2.msra.mxu0 0.0
      %858 = vmatprep.subr.mxu0 0.0
      %859 = vmatpush2.msra.mxu0 0.0
      %860 = vmatprep.subr.mxu0 0.0
      %861 = vmatpush2.msra.mxu0 0.0
      %862 = vmatprep.subr.mxu0 0.0
      %863 = vmatpush2.msra.mxu0 0.0
      %864 = vmatprep.subr.mxu0 0.0
      %865 = vmatpush2.msra.mxu0 0.0
      %866 = vmatprep.subr.mxu0 0.0
      %867 = vmatpush2.msra.mxu0 0.0
      %868 = vmatprep.subr.mxu0 0.0
      %869 = vmatpush2.msra.mxu0 0.0
      %870 = vmatprep.subr.mxu0 0.0
      %871 = vmatpush2.msra.mxu0 0.0
      %872 = vmatprep.subr.mxu0 0.0
      %873 = vmatpush2.msra.mxu0 0.0
      %874 = vmatprep.subr.mxu0 0.0
      %875 = vmatpush2.msra.mxu0 0.0
      %876 = vmatprep.subr.mxu0 0.0
      %877 = vmatpush2.msra.mxu0 0.0
      %878 = vmatprep.subr.mxu0 0.0
      %879 = vmatpush2.msra.mxu0 0.0
      %880 = vmatprep.subr.mxu0 0.0
      %881 = vmatpush2.msra.mxu0 0.0
      %882 = vmatprep.subr.mxu0 0.0
      %883 = vmatpush2.msra.mxu0 0.0
      %884 = vmatprep.mubr.f32.mxu0 0.0
      %885 = vmatmul.mubr.f32.gmra.mxu0 %v579
      %v886 = vpop.f32.mrf.mxu0
      %v887 = vadd.f32 0.0, %v886
      %v888 = vpop.f32.mrf.mxu0
      %889 = vmatprep.mubr.f32.mxu0 0.0
      %890 = vmatmul.mubr.f32.gmra.mxu0 %v581
      %v891 = vpop.f32.mrf.mxu0
      %v892 = vadd.f32 0.0, %v891
      %v893 = vpop.f32.mrf.mxu0
      %894 = vmatprep.mubr.f32.mxu0 0.0
      %895 = vmatmul.mubr.f32.gmra.mxu0 %v596
      %v896 = vpop.f32.mrf.mxu0
      %v897 = vadd.f32 0.0, %v896
      %v898 = vpop.f32.mrf.mxu0
      %899 = vmatprep.mubr.f32.mxu0 0.0
      %900 = vmatmul.mubr.f32.gmra.mxu0 %v599
      %v901 = vpop.f32.mrf.mxu0
      %v902 = vadd.f32 0.0, %v901
      %v903 = vpop.f32.mrf.mxu0
      %904 = vdwg.mxu0
      %v905 = vadd.f32 %v785, %v887
      %v906 = vadd.f32 %v790, %v892
      %v907 = vadd.f32 %v795, %v897
      %v908 = vadd.f32 %v800, %v902
      %v909 = vld [vmem:[%s6] sm:$0x1]
      %v911 = vlaneseq
      %v912 = vshrl.u32 %v911, 7
      %v913 = vsub.s32 0, %v912
      %v914 = vrot.slane %v909, %v913
      %v916 = vadd.f32 %v905, %v914
      %v917 = vadd.f32 %v906, %v914
      %v918 = vadd.f32 %v907, %v914
      %v919 = vadd.f32 %v908, %v914
      %v920 = vmax.f32 %v916, 0.0
      %v921 = vmax.f32 %v917, 0.0
      %v922 = vmax.f32 %v918, 0.0
      %v923 = vmax.f32 %v919, 0.0
      %v926 = vrot.slane %v922, 7
      %v927 = vrot.slane %v923, 7
      %v928 = vsel %vm584, %v926, %v927
      %v931 = vsel %vm584, 0.0, %v926
      %v934 = vrot.slane %v920, 1
      %v935 = vrot.slane %v921, 1
      %v936 = vsel %vm593, %v934, %v935
      %v939 = vsel %vm593, %v935, 0.0
      %v940 = vld [vmem:[%s7] sm:$0xff]
      %v941 = vld [vmem:[%s7 + $0x8] sm:$0xff]
      %v942 = vld [vmem:[%s7 + $0x10] sm:$0xff]
      %v943 = vld [vmem:[%s7 + $0x18] sm:$0xff]
      %v944 = vld [vmem:[%s7 + $0x20] sm:$0xff]
      %v945 = vld [vmem:[%s7 + $0x28] sm:$0xff]
      %v946 = vld [vmem:[%s7 + $0x30] sm:$0xff]
      %v947 = vld [vmem:[%s7 + $0x38] sm:$0xff]
      %v948 = vld [vmem:[%s7 + $0x40] sm:$0xff]
      %v949 = vld [vmem:[%s7 + $0x48] sm:$0xff]
      %v950 = vld [vmem:[%s7 + $0x50] sm:$0xff]
      %v951 = vld [vmem:[%s7 + $0x58] sm:$0xff]
      %v952 = vld [vmem:[%s7 + $0x60] sm:$0xff]
      %v953 = vld [vmem:[%s7 + $0x68] sm:$0xff]
      %v954 = vld [vmem:[%s7 + $0x70] sm:$0xff]
      %v955 = vld [vmem:[%s7 + $0x78] sm:$0xff]
      %s956 = scalar_lea.vmem %s7, 128
      %v957 = vld [vmem:[%s956] sm:$0xff]
      %v958 = vld [vmem:[%s956 + $0x8] sm:$0xff]
      %v959 = vld [vmem:[%s956 + $0x10] sm:$0xff]
      %v960 = vld [vmem:[%s956 + $0x18] sm:$0xff]
      %v961 = vld [vmem:[%s956 + $0x20] sm:$0xff]
      %v962 = vld [vmem:[%s956 + $0x28] sm:$0xff]
      %v963 = vld [vmem:[%s956 + $0x30] sm:$0xff]
      %v964 = vld [vmem:[%s956 + $0x38] sm:$0xff]
      %v965 = vld [vmem:[%s956 + $0x40] sm:$0xff]
      %v966 = vld [vmem:[%s956 + $0x48] sm:$0xff]
      %v967 = vld [vmem:[%s956 + $0x50] sm:$0xff]
      %v968 = vld [vmem:[%s956 + $0x58] sm:$0xff]
      %v969 = vld [vmem:[%s956 + $0x60] sm:$0xff]
      %v970 = vld [vmem:[%s956 + $0x68] sm:$0xff]
      %v971 = vld [vmem:[%s956 + $0x70] sm:$0xff]
      %v972 = vld [vmem:[%s956 + $0x78] sm:$0xff]
      %973 = vmatprep.subr.mxu0 0.0
      %974 = vmatpush1.msra.mxu0 %v972
      %975 = vmatprep.subr.mxu0 0.0
      %976 = vmatpush1.msra.mxu0 %v971
      %977 = vmatprep.subr.mxu0 0.0
      %978 = vmatpush1.msra.mxu0 %v970
      %979 = vmatprep.subr.mxu0 0.0
      %980 = vmatpush1.msra.mxu0 %v969
      %981 = vmatprep.subr.mxu0 0.0
      %982 = vmatpush1.msra.mxu0 %v968
      %983 = vmatprep.subr.mxu0 0.0
      %984 = vmatpush1.msra.mxu0 %v967
      %985 = vmatprep.subr.mxu0 0.0
      %986 = vmatpush1.msra.mxu0 %v966
      %987 = vmatprep.subr.mxu0 0.0
      %988 = vmatpush1.msra.mxu0 %v965
      %989 = vmatprep.subr.mxu0 0.0
      %990 = vmatpush1.msra.mxu0 %v964
      %991 = vmatprep.subr.mxu0 0.0
      %992 = vmatpush1.msra.mxu0 %v963
      %993 = vmatprep.subr.mxu0 0.0
      %994 = vmatpush1.msra.mxu0 %v962
      %995 = vmatprep.subr.mxu0 0.0
      %996 = vmatpush1.msra.mxu0 %v961
      %997 = vmatprep.subr.mxu0 0.0
      %998 = vmatpush1.msra.mxu0 %v960
      %999 = vmatprep.subr.mxu0 0.0
      %1000 = vmatpush1.msra.mxu0 %v959
      %1001 = vmatprep.subr.mxu0 0.0
      %1002 = vmatpush1.msra.mxu0 %v958
      %1003 = vmatprep.subr.mxu0 0.0
      %1004 = vmatpush1.msra.mxu0 %v957
      %1005 = vmatprep.subr.mxu0 0.0
      %1006 = vmatpush2.msra.mxu0 0.0
      %1007 = vmatprep.subr.mxu0 0.0
      %1008 = vmatpush2.msra.mxu0 0.0
      %1009 = vmatprep.subr.mxu0 0.0
      %1010 = vmatpush2.msra.mxu0 0.0
      %1011 = vmatprep.subr.mxu0 0.0
      %1012 = vmatpush2.msra.mxu0 0.0
      %1013 = vmatprep.subr.mxu0 0.0
      %1014 = vmatpush2.msra.mxu0 0.0
      %1015 = vmatprep.subr.mxu0 0.0
      %1016 = vmatpush2.msra.mxu0 0.0
      %1017 = vmatprep.subr.mxu0 0.0
      %1018 = vmatpush2.msra.mxu0 0.0
      %1019 = vmatprep.subr.mxu0 0.0
      %1020 = vmatpush2.msra.mxu0 0.0
      %1021 = vmatprep.subr.mxu0 0.0
      %1022 = vmatpush2.msra.mxu0 0.0
      %1023 = vmatprep.subr.mxu0 0.0
      %1024 = vmatpush2.msra.mxu0 0.0
      %1025 = vmatprep.subr.mxu0 0.0
      %1026 = vmatpush2.msra.mxu0 0.0
      %1027 = vmatprep.subr.mxu0 0.0
      %1028 = vmatpush2.msra.mxu0 0.0
      %1029 = vmatprep.subr.mxu0 0.0
      %1030 = vmatpush2.msra.mxu0 0.0
      %1031 = vmatprep.subr.mxu0 0.0
      %1032 = vmatpush2.msra.mxu0 0.0
      %1033 = vmatprep.subr.mxu0 0.0
      %1034 = vmatpush2.msra.mxu0 0.0
      %1035 = vmatprep.subr.mxu0 0.0
      %1036 = vmatpush2.msra.mxu0 0.0
      %1037 = vmatprep.mubr.f32.mxu0 0.0
      %1038 = vmatmul.mubr.f32.gmra.mxu0 %v920
      %v1039 = vpop.f32.mrf.mxu0
      %v1040 = vadd.f32 0.0, %v1039
      %v1041 = vpop.f32.mrf.mxu0
      %1042 = vmatprep.mubr.f32.mxu0 0.0
      %1043 = vmatmul.mubr.f32.gmra.mxu0 %v921
      %v1044 = vpop.f32.mrf.mxu0
      %v1045 = vadd.f32 0.0, %v1044
      %v1046 = vpop.f32.mrf.mxu0
      %1047 = vmatprep.mubr.f32.mxu0 0.0
      %1048 = vmatmul.mubr.f32.gmra.mxu0 %v922
      %v1049 = vpop.f32.mrf.mxu0
      %v1050 = vadd.f32 0.0, %v1049
      %v1051 = vpop.f32.mrf.mxu0
      %1052 = vmatprep.mubr.f32.mxu0 0.0
      %1053 = vmatmul.mubr.f32.gmra.mxu0 %v923
      %v1054 = vpop.f32.mrf.mxu0
      %v1055 = vadd.f32 0.0, %v1054
      %v1056 = vpop.f32.mrf.mxu0
      %1057 = vdwg.mxu0
      %1058 = vmatprep.subr.mxu0 0.0
      %1059 = vmatpush1.msra.mxu0 %v955
      %1060 = vmatprep.subr.mxu0 0.0
      %1061 = vmatpush1.msra.mxu0 %v954
      %1062 = vmatprep.subr.mxu0 0.0
      %1063 = vmatpush1.msra.mxu0 %v953
      %1064 = vmatprep.subr.mxu0 0.0
      %1065 = vmatpush1.msra.mxu0 %v952
      %1066 = vmatprep.subr.mxu0 0.0
      %1067 = vmatpush1.msra.mxu0 %v951
      %1068 = vmatprep.subr.mxu0 0.0
      %1069 = vmatpush1.msra.mxu0 %v950
      %1070 = vmatprep.subr.mxu0 0.0
      %1071 = vmatpush1.msra.mxu0 %v949
      %1072 = vmatprep.subr.mxu0 0.0
      %1073 = vmatpush1.msra.mxu0 %v948
      %1074 = vmatprep.subr.mxu0 0.0
      %1075 = vmatpush1.msra.mxu0 %v947
      %1076 = vmatprep.subr.mxu0 0.0
      %1077 = vmatpush1.msra.mxu0 %v946
      %1078 = vmatprep.subr.mxu0 0.0
      %1079 = vmatpush1.msra.mxu0 %v945
      %1080 = vmatprep.subr.mxu0 0.0
      %1081 = vmatpush1.msra.mxu0 %v944
      %1082 = vmatprep.subr.mxu0 0.0
      %1083 = vmatpush1.msra.mxu0 %v943
      %1084 = vmatprep.subr.mxu0 0.0
      %1085 = vmatpush1.msra.mxu0 %v942
      %1086 = vmatprep.subr.mxu0 0.0
      %1087 = vmatpush1.msra.mxu0 %v941
      %1088 = vmatprep.subr.mxu0 0.0
      %1089 = vmatpush1.msra.mxu0 %v940
      %1090 = vmatprep.subr.mxu0 0.0
      %1091 = vmatpush2.msra.mxu0 0.0
      %1092 = vmatprep.subr.mxu0 0.0
      %1093 = vmatpush2.msra.mxu0 0.0
      %1094 = vmatprep.subr.mxu0 0.0
      %1095 = vmatpush2.msra.mxu0 0.0
      %1096 = vmatprep.subr.mxu0 0.0
      %1097 = vmatpush2.msra.mxu0 0.0
      %1098 = vmatprep.subr.mxu0 0.0
      %1099 = vmatpush2.msra.mxu0 0.0
      %1100 = vmatprep.subr.mxu0 0.0
      %1101 = vmatpush2.msra.mxu0 0.0
      %1102 = vmatprep.subr.mxu0 0.0
      %1103 = vmatpush2.msra.mxu0 0.0
      %1104 = vmatprep.subr.mxu0 0.0
      %1105 = vmatpush2.msra.mxu0 0.0
      %1106 = vmatprep.subr.mxu0 0.0
      %1107 = vmatpush2.msra.mxu0 0.0
      %1108 = vmatprep.subr.mxu0 0.0
      %1109 = vmatpush2.msra.mxu0 0.0
      %1110 = vmatprep.subr.mxu0 0.0
      %1111 = vmatpush2.msra.mxu0 0.0
      %1112 = vmatprep.subr.mxu0 0.0
      %1113 = vmatpush2.msra.mxu0 0.0
      %1114 = vmatprep.subr.mxu0 0.0
      %1115 = vmatpush2.msra.mxu0 0.0
      %1116 = vmatprep.subr.mxu0 0.0
      %1117 = vmatpush2.msra.mxu0 0.0
      %1118 = vmatprep.subr.mxu0 0.0
      %1119 = vmatpush2.msra.mxu0 0.0
      %1120 = vmatprep.subr.mxu0 0.0
      %1121 = vmatpush2.msra.mxu0 0.0
      %1122 = vmatprep.mubr.f32.mxu0 0.0
      %1123 = vmatmul.mubr.f32.gmra.mxu0 %v931
      %v1124 = vpop.f32.mrf.mxu0
      %v1125 = vadd.f32 %v1040, %v1124
      %v1126 = vpop.f32.mrf.mxu0
      %1127 = vmatprep.mubr.f32.mxu0 0.0
      %1128 = vmatmul.mubr.f32.gmra.mxu0 %v928
      %v1129 = vpop.f32.mrf.mxu0
      %v1130 = vadd.f32 %v1045, %v1129
      %v1131 = vpop.f32.mrf.mxu0
      %1132 = vmatprep.mubr.f32.mxu0 0.0
      %1133 = vmatmul.mubr.f32.gmra.mxu0 %v920
      %v1134 = vpop.f32.mrf.mxu0
      %v1135 = vadd.f32 %v1050, %v1134
      %v1136 = vpop.f32.mrf.mxu0
      %1137 = vmatprep.mubr.f32.mxu0 0.0
      %1138 = vmatmul.mubr.f32.gmra.mxu0 %v921
      %v1139 = vpop.f32.mrf.mxu0
      %v1140 = vadd.f32 %v1055, %v1139
      %v1141 = vpop.f32.mrf.mxu0
      %1142 = vdwg.mxu0
      %s1143 = scalar_lea.vmem %s7, 256
      %v1144 = vld [vmem:[%s1143] sm:$0xff]
      %v1145 = vld [vmem:[%s1143 + $0x8] sm:$0xff]
      %v1146 = vld [vmem:[%s1143 + $0x10] sm:$0xff]
      %v1147 = vld [vmem:[%s1143 + $0x18] sm:$0xff]
      %v1148 = vld [vmem:[%s1143 + $0x20] sm:$0xff]
      %v1149 = vld [vmem:[%s1143 + $0x28] sm:$0xff]
      %v1150 = vld [vmem:[%s1143 + $0x30] sm:$0xff]
      %v1151 = vld [vmem:[%s1143 + $0x38] sm:$0xff]
      %v1152 = vld [vmem:[%s1143 + $0x40] sm:$0xff]
      %v1153 = vld [vmem:[%s1143 + $0x48] sm:$0xff]
      %v1154 = vld [vmem:[%s1143 + $0x50] sm:$0xff]
      %v1155 = vld [vmem:[%s1143 + $0x58] sm:$0xff]
      %v1156 = vld [vmem:[%s1143 + $0x60] sm:$0xff]
      %v1157 = vld [vmem:[%s1143 + $0x68] sm:$0xff]
      %v1158 = vld [vmem:[%s1143 + $0x70] sm:$0xff]
      %v1159 = vld [vmem:[%s1143 + $0x78] sm:$0xff]
      %1160 = vmatprep.subr.mxu0 0.0
      %1161 = vmatpush1.msra.mxu0 %v1159
      %1162 = vmatprep.subr.mxu0 0.0
      %1163 = vmatpush1.msra.mxu0 %v1158
      %1164 = vmatprep.subr.mxu0 0.0
      %1165 = vmatpush1.msra.mxu0 %v1157
      %1166 = vmatprep.subr.mxu0 0.0
      %1167 = vmatpush1.msra.mxu0 %v1156
      %1168 = vmatprep.subr.mxu0 0.0
      %1169 = vmatpush1.msra.mxu0 %v1155
      %1170 = vmatprep.subr.mxu0 0.0
      %1171 = vmatpush1.msra.mxu0 %v1154
      %1172 = vmatprep.subr.mxu0 0.0
      %1173 = vmatpush1.msra.mxu0 %v1153
      %1174 = vmatprep.subr.mxu0 0.0
      %1175 = vmatpush1.msra.mxu0 %v1152
      %1176 = vmatprep.subr.mxu0 0.0
      %1177 = vmatpush1.msra.mxu0 %v1151
      %1178 = vmatprep.subr.mxu0 0.0
      %1179 = vmatpush1.msra.mxu0 %v1150
      %1180 = vmatprep.subr.mxu0 0.0
      %1181 = vmatpush1.msra.mxu0 %v1149
      %1182 = vmatprep.subr.mxu0 0.0
      %1183 = vmatpush1.msra.mxu0 %v1148
      %1184 = vmatprep.subr.mxu0 0.0
      %1185 = vmatpush1.msra.mxu0 %v1147
      %1186 = vmatprep.subr.mxu0 0.0
      %1187 = vmatpush1.msra.mxu0 %v1146
      %1188 = vmatprep.subr.mxu0 0.0
      %1189 = vmatpush1.msra.mxu0 %v1145
      %1190 = vmatprep.subr.mxu0 0.0
      %1191 = vmatpush1.msra.mxu0 %v1144
      %1192 = vmatprep.subr.mxu0 0.0
      %1193 = vmatpush2.msra.mxu0 0.0
      %1194 = vmatprep.subr.mxu0 0.0
      %1195 = vmatpush2.msra.mxu0 0.0
      %1196 = vmatprep.subr.mxu0 0.0
      %1197 = vmatpush2.msra.mxu0 0.0
      %1198 = vmatprep.subr.mxu0 0.0
      %1199 = vmatpush2.msra.mxu0 0.0
      %1200 = vmatprep.subr.mxu0 0.0
      %1201 = vmatpush2.msra.mxu0 0.0
      %1202 = vmatprep.subr.mxu0 0.0
      %1203 = vmatpush2.msra.mxu0 0.0
      %1204 = vmatprep.subr.mxu0 0.0
      %1205 = vmatpush2.msra.mxu0 0.0
      %1206 = vmatprep.subr.mxu0 0.0
      %1207 = vmatpush2.msra.mxu0 0.0
      %1208 = vmatprep.subr.mxu0 0.0
      %1209 = vmatpush2.msra.mxu0 0.0
      %1210 = vmatprep.subr.mxu0 0.0
      %1211 = vmatpush2.msra.mxu0 0.0
      %1212 = vmatprep.subr.mxu0 0.0
      %1213 = vmatpush2.msra.mxu0 0.0
      %1214 = vmatprep.subr.mxu0 0.0
      %1215 = vmatpush2.msra.mxu0 0.0
      %1216 = vmatprep.subr.mxu0 0.0
      %1217 = vmatpush2.msra.mxu0 0.0
      %1218 = vmatprep.subr.mxu0 0.0
      %1219 = vmatpush2.msra.mxu0 0.0
      %1220 = vmatprep.subr.mxu0 0.0
      %1221 = vmatpush2.msra.mxu0 0.0
      %1222 = vmatprep.subr.mxu0 0.0
      %1223 = vmatpush2.msra.mxu0 0.0
      %1224 = vmatprep.mubr.f32.mxu0 0.0
      %1225 = vmatmul.mubr.f32.gmra.mxu0 %v922
      %v1226 = vpop.f32.mrf.mxu0
      %v1227 = vadd.f32 0.0, %v1226
      %v1228 = vpop.f32.mrf.mxu0
      %1229 = vmatprep.mubr.f32.mxu0 0.0
      %1230 = vmatmul.mubr.f32.gmra.mxu0 %v923
      %v1231 = vpop.f32.mrf.mxu0
      %v1232 = vadd.f32 0.0, %v1231
      %v1233 = vpop.f32.mrf.mxu0
      %1234 = vmatprep.mubr.f32.mxu0 0.0
      %1235 = vmatmul.mubr.f32.gmra.mxu0 %v936
      %v1236 = vpop.f32.mrf.mxu0
      %v1237 = vadd.f32 0.0, %v1236
      %v1238 = vpop.f32.mrf.mxu0
      %1239 = vmatprep.mubr.f32.mxu0 0.0
      %1240 = vmatmul.mubr.f32.gmra.mxu0 %v939
      %v1241 = vpop.f32.mrf.mxu0
      %v1242 = vadd.f32 0.0, %v1241
      %v1243 = vpop.f32.mrf.mxu0
      %1244 = vdwg.mxu0
      %v1245 = vadd.f32 %v1125, %v1227
      %v1246 = vadd.f32 %v1130, %v1232
      %v1247 = vadd.f32 %v1135, %v1237
      %v1248 = vadd.f32 %v1140, %v1242
      %v1249 = vld [vmem:[%s8] sm:$0x1]
      %v1251 = vlaneseq
      %v1252 = vshrl.u32 %v1251, 7
      %v1253 = vsub.s32 0, %v1252
      %v1254 = vrot.slane %v1249, %v1253
      %v1256 = vadd.f32 %v1245, %v1254
      %v1257 = vadd.f32 %v1246, %v1254
      %v1258 = vadd.f32 %v1247, %v1254
      %v1259 = vadd.f32 %v1248, %v1254
      %v1260 = vmax.f32 %v1256, 0.0
      %v1261 = vmax.f32 %v1257, 0.0
      %v1262 = vmax.f32 %v1258, 0.0
      %v1263 = vmax.f32 %v1259, 0.0
      %1264 = vst [vmem:[%s352] sm:$0xff] %v1260
      %1265 = vst [vmem:[%s352 + $0x8] sm:$0xff] %v1261
      %1266 = vst [vmem:[%s352 + $0x10] sm:$0xff] %v1262
      %1267 = vst [vmem:[%s352 + $0x18] sm:$0xff] %v1263
      %p1268 = scmp.lt.s32.totalorder %s20, 1
      %s1269 = scalar_select %p1268, %s20, 1
      %s1270 = smul.addr %s1269, 4
      %s1271 = smul.addr %s1270, 8
      %s1272 = scalar_lea.vmem %s9, %s1271
      // Predicated region
      $region57: #{upblock_forward.1} parent=55 // pred_check
        %p1273 = pneg %p237
      $region58: #{upblock_forward.1} parent=55 // pred_check_branch
        %1275 = sbr.rel (%p1273) target = $region60
      $region59: #{upblock_forward.1} parent=55 // pred_region
        _
      $region60: #{upblock_forward.1} parent=55 // pred_fallthru
        _
    $region56: #{upblock_forward.1} parent=5 // pred_fallthru
      _
    %p1276 = scmp.le.s32.totalorder 2, %s15
    // Predicated region
    $region61: #{upblock_forward.1} parent=5 // pred_check
      %p1277 = pneg %p1276
    $region62: #{upblock_forward.1} parent=5 // pred_check_branch
      %1279 = sbr.rel (%p1277) target = $region64
    $region63: #{upblock_forward.1} parent=5 // pred_region
      %s1280 = ssub.s32 %s15, 2
      // Predicated region
      $region65: #{upblock_forward.1} parent=63 // pred_check
        %p1281 = pneg %p243
      $region66: #{upblock_forward.1} parent=63 // pred_check_branch
        %1283 = sbr.rel (%p1281) target = $region68
      $region67: #{upblock_forward.1} parent=63 // pred_region
        %p1284 = scmp.lt.s32.totalorder %s21, 1
        %s1285 = scalar_select %p1284, %s21, 1
        %s1286 = smul.addr %s1285, 4
        %s1287 = smul.addr %s1286, 8
        %s1288 = scalar_lea.vmem %s9, %s1287
      $region68: #{upblock_forward.1} parent=63 // pred_fallthru
        _
    $region64: #{upblock_forward.1} parent=5 // pred_fallthru
      _
  $region6: #{upblock_forward.1} parent=0 // loop_footer
    %s19 = sadd.s32 1, %s15
  $region7: #{upblock_forward.1} parent=0 // loop_footer_branch
    %14 = sbr.rel target = $region3
  $region8: #{upblock_forward.1} parent=0 // loop_exit
    _

</llo_original>
